<compile_context>
chip_gen: v7x
topology: tpu7x:2x2x1
jax: 0.10.0
libtpu: 0.0.40
codegen_flags: <defaults>
</compile_context>

<pallas_src>
import functools

import jax
import jax.numpy as jnp
from jax.experimental import pallas as pl
from jax.experimental.pallas import tpu as pltpu


# --------------------------------------------------------------------------
# device-gated knobs
# --------------------------------------------------------------------------
def _device_kind() -> str:
    try:
        return jax.devices()[0].device_kind.lower()
    except Exception:
        return ""


def _select_compute_dtype(logits_dtype):
    """bf16 sweep only where the VPU/EUP have bf16 (v6e, v7x); f32 elsewhere."""
    kind = _device_kind()
    has_bf16_vpu = ("v6" in kind) or ("v7" in kind) or ("7x" in kind)
    if has_bf16_vpu and jnp.dtype(logits_dtype) == jnp.dtype(jnp.bfloat16):
        return jnp.bfloat16
    return jnp.float32


def _budgets():
    """(logits-tile byte budget, vmem_limit_bytes) per TPU generation."""
    kind = _device_kind()
    if ("v7" in kind) or ("7x" in kind):
        # 64 MiB VMEM per TC; leave room for f32 temporaries + double buffering
        return 3 << 20, 40 << 20
    if ("v6" in kind) or ("v5" in kind):
        # 128 MiB physical VMEM: bigger tiles amortize the ~0.35us/step overhead
        return 8 << 20, 96 << 20
    # unknown chip -> conservative defaults
    return 4 << 20, 32 << 20


# --------------------------------------------------------------------------
# kernel
# --------------------------------------------------------------------------
def _ppo_ptx_kernel(lp_ref, olp_ref, adv_ref, mask_ref, logits_ref, labels_ref,
                    out_ref,
                    m_scr, se_scr, ll_scr, nll_acc, cnt_acc, *,
                    clip_eps, compute_dtype, vocab_size, needs_vmask):
    t = pl.program_id(1)          # token-tile index within this shard
    v = pl.program_id(2)          # vocab-block index
    nt = pl.num_programs(1)
    nv = pl.num_programs(2)

    # ---- per-shard init of the streaming accumulators --------------------
    @pl.when(jnp.logical_and(t == 0, v == 0))
    def _init_shard():
        nll_acc[...] = jnp.zeros_like(nll_acc)
        cnt_acc[...] = jnp.zeros_like(cnt_acc)

    # ---- per-token-tile init of the online-softmax state ------------------
    @pl.when(v == 0)
    def _init_tile():
        m_scr[...] = jnp.full_like(m_scr, -jnp.inf)
        se_scr[...] = jnp.zeros_like(se_scr)
        ll_scr[...] = jnp.zeros_like(ll_scr)

    # ---- fused sweep over this (TILE_T, TILE_V) block ---------------------
    x = logits_ref[...].astype(compute_dtype)        # no-op cast on bf16 path
    lab = labels_ref[...]                             # (T, 1) int32
    tv = logits_ref.shape[-1]

    # vocab ids as a (1, TILE_V) row -- no (T, V) iota materialized
    ids = jax.lax.broadcasted_iota(jnp.int32, (1, tv), 1) + v * tv
    if needs_vmask:  # static: only when V % TILE_V != 0 (partial last block)
        x = jnp.where(ids < vocab_size, x, jnp.array(-jnp.inf, compute_dtype))

    m_loc = jnp.max(x, axis=-1, keepdims=True)        # (T, 1) compute dtype
    e = jnp.exp(x - m_loc)                            # EUP (bf16 on v6e/v7x)
    se_loc = jnp.sum(e.astype(jnp.float32), axis=-1, keepdims=True)
    hit = ids == lab                                  # (T, TV) via broadcast
    # one nonzero per row -> exact even in bf16
    ll_loc = jnp.sum(jnp.where(hit, x, jnp.zeros((), compute_dtype)),
                     axis=-1, keepdims=True).astype(jnp.float32)

    # online-softmax merge: all (T, 1) f32 -> negligible
    m_loc = m_loc.astype(jnp.float32)
    m_new = jnp.maximum(m_scr[...], m_loc)
    se_scr[...] = (se_scr[...] * jnp.exp(m_scr[...] - m_new)
                   + se_loc * jnp.exp(m_loc - m_new))
    ll_scr[...] = ll_scr[...] + ll_loc
    m_scr[...] = m_new

    # ---- token-tile finalize: accumulate nll / valid count ---------------
    @pl.when(v == nv - 1)
    def _tile_done():
        lse = jnp.log(se_scr[...]) + m_scr[...]
        valid = lab != -100                           # ignore_index / padding
        # true select: garbage rows (padding) may be NaN/Inf and are dropped
        nll_acc[...] += jnp.where(valid, lse - ll_scr[...], 0.0)
        cnt_acc[...] += valid.astype(jnp.float32)

    # ---- shard finalize: policy loss + pack partials into the out block ---
    @pl.when(jnp.logical_and(t == nt - 1, v == nv - 1))
    def _shard_done():
        lp = lp_ref[...].astype(jnp.float32)
        olp = olp_ref[...].astype(jnp.float32)
        adv = adv_ref[...].astype(jnp.float32)
        msk = mask_ref[...].astype(jnp.float32)

        ratio = jnp.exp(lp - olp)
        surr1 = ratio * adv
        surr2 = jnp.clip(ratio, 1.0 - clip_eps, 1.0 + clip_eps) * adv
        ploss = -jnp.minimum(surr1, surr2)
        # masked_mean over action dim, then mean over batch (no zero-row guard,
        # matching the reference masked_mean semantics)
        row_num = jnp.sum(ploss * msk, axis=1, keepdims=True)
        row_den = jnp.sum(msk, axis=1, keepdims=True)
        policy = jnp.sum(row_num / row_den) / jnp.float32(lp.shape[0])

        total_nll = jnp.sum(nll_acc[...])             # single scalar reduce
        total_cnt = jnp.sum(cnt_acc[...])

        lane = jax.lax.broadcasted_iota(jnp.int32, (8, 128), 1)
        row = jax.lax.broadcasted_iota(jnp.int32, (8, 128), 0)
        res = jnp.where(jnp.logical_and(row == 0, lane == 0), total_nll, 0.0)
        res = jnp.where(jnp.logical_and(row == 0, lane == 1), total_cnt, res)
        res = jnp.where(jnp.logical_and(row == 0, lane == 2), policy, res)
        out_ref[...] = res


# --------------------------------------------------------------------------
# wrapper
# --------------------------------------------------------------------------
def ppo_ptx_actor_loss(log_probs, old_log_probs, advantages, lm_logits,
                       lm_input_ids, action_mask, *,
                       policy_clip_eps: float = 0.2,
                       pretrain_coef: float = 0.0,
                       compute_dtype=None,
                       tile_t: int = None,
                       tile_v: int = None):
    B, A = log_probs.shape
    Bl, S, V = lm_logits.shape
    N = Bl * S
    itemsize = jnp.dtype(lm_logits.dtype).itemsize

    if compute_dtype is None:
        compute_dtype = _select_compute_dtype(lm_logits.dtype)
    tile_budget, vmem_limit = _budgets()

    # ---- vocab blocking: lane-dense tiles independent of V ----------------
    if tile_v is None:
        tile_v = V if V <= 8192 else 8192
    needs_vmask = (V % tile_v) != 0
    grid_v = pl.cdiv(V, tile_v)

    # ---- token rows per tile: multiple of the dtype-native sublane pack ---
    row_align = 16 if itemsize == 2 else (32 if itemsize == 1 else 8)
    if tile_t is None:
        tile_t = tile_budget // max(tile_v * itemsize, 1)
        tile_t = max(row_align, min(1024, (tile_t // row_align) * row_align))
    tile_t = min(tile_t, pl.cdiv(N, row_align) * row_align)
    grid_t = pl.cdiv(N, tile_t)
    n_pad = grid_t * tile_t

    # ---- shard token tiles over TensorCores (v7x megacore) ----------------
    # harmless serial loop on 1-TC chips (v5e/v6e)
    num_shards = 2 if (grid_t >= 2 and grid_t % 2 == 0) else 1
    tiles_per_shard = grid_t // num_shards

    # Flatten tokens; reshape is free (contiguous).
    logits2d = lm_logits.reshape(N, V)

    # Shifted labels with ignore_index folded in (no logits[:, :-1, :] copy):
    # label(b, s) = ids[b, s+1] for s < S-1, else -100; pad to grid multiple.
    shifted = jnp.concatenate(
        [lm_input_ids[:, 1:],
         jnp.full((Bl, 1), -100, lm_input_ids.dtype)], axis=1).reshape(-1)
    labels = jnp.full((n_pad, 1), -100, jnp.int32)
    labels = labels.at[:N, 0].set(shifted.astype(jnp.int32))

    kernel = functools.partial(
        _ppo_ptx_kernel,
        clip_eps=float(policy_clip_eps),
        compute_dtype=compute_dtype,
        vocab_size=V,
        needs_vmask=needs_vmask)

    cost = pl.CostEstimate(
        flops=int(6 * N * V),
        transcendentals=int(N * V),
        bytes_accessed=int(N * V * itemsize + n_pad * 4 + 4 * B * A * 4
                           + num_shards * 8 * 128 * 4),
    )

    out = pl.pallas_call(
        kernel,
        grid=(num_shards, tiles_per_shard, grid_v),
        in_specs=[
            # tiny policy tensors: constant block index -> DMA'd once, resident
            pl.BlockSpec((B, A), lambda s, t, v: (0, 0)),
            pl.BlockSpec((B, A), lambda s, t, v: (0, 0)),
            pl.BlockSpec((B, A), lambda s, t, v: (0, 0)),
            pl.BlockSpec((B, A), lambda s, t, v: (0, 0)),
            # streamed logits tile and matching labels tile
            # TODO(synk): on v5e, pipeline_mode=pl.Buffered(3) here if profiling
            # shows exposed DMA at small tiles.
            pl.BlockSpec((tile_t, tile_v),
                         lambda s, t, v: (s * tiles_per_shard + t, v)),
            pl.BlockSpec((tile_t, 1),
                         lambda s, t, v: (s * tiles_per_shard + t, 0)),
        ],
        out_specs=pl.BlockSpec((8, 128), lambda s, t, v: (s, 0)),
        out_shape=jax.ShapeDtypeStruct((num_shards * 8, 128), jnp.float32),
        scratch_shapes=[
            pltpu.VMEM((tile_t, 1), jnp.float32),   # running row max
            pltpu.VMEM((tile_t, 1), jnp.float32),   # running sum(exp(x - m))
            pltpu.VMEM((tile_t, 1), jnp.float32),   # label logit
            pltpu.VMEM((tile_t, 1), jnp.float32),   # per-row nll accumulator
            pltpu.VMEM((tile_t, 1), jnp.float32),   # per-row valid-count acc
        ],
        compiler_params=pltpu.CompilerParams(
            # token-tile / vocab axes carry the accumulators -> "arbitrary";
            # the leading shard axis is "parallel" (v7x megacore)
            dimension_semantics=("parallel", "arbitrary", "arbitrary"),
            vmem_limit_bytes=vmem_limit,
        ),
        cost_estimate=cost,
    )(log_probs, old_log_probs, advantages, action_mask, logits2d, labels)

    # tiny epilogue: combine per-shard partials + add the policy term
    parts = out.reshape(num_shards, 8, 128)
    total_nll = jnp.sum(parts[:, 0, 0])
    total_cnt = jnp.sum(parts[:, 0, 1])
    policy_loss = parts[0, 0, 2]
    lm_loss = total_nll / jnp.maximum(total_cnt, 1.0)
    return policy_loss + jnp.float32(pretrain_coef) * lm_loss


# --------------------------------------------------------------------------
# pure-JAX reference
# --------------------------------------------------------------------------
def _reference(log_probs, old_log_probs, advantages, lm_logits, lm_input_ids,
               action_mask, clip_eps=0.2, pretrain_coef=0.0):
    ratio = jnp.exp(log_probs - old_log_probs)
    surr1 = ratio * advantages
    surr2 = jnp.clip(ratio, 1 - clip_eps, 1 + clip_eps) * advantages
    loss = -jnp.minimum(surr1, surr2)
    row = jnp.sum(loss * action_mask, axis=1) / jnp.sum(action_mask, axis=1)
    policy_loss = jnp.mean(row)

    logits_f32 = lm_logits.astype(jnp.float32)
    sl = logits_f32[:, :-1, :].reshape(-1, logits_f32.shape[-1])
    lab = lm_input_ids[:, 1:].reshape(-1)
    logp = jax.nn.log_softmax(sl, axis=-1)
    nll = -jnp.take_along_axis(logp, lab[:, None], axis=-1)[:, 0]
    valid = (lab != -100).astype(jnp.float32)
    lm_loss = jnp.sum(nll * valid) / jnp.maximum(jnp.sum(valid), 1.0)
    return policy_loss + pretrain_coef * lm_loss


if __name__ == "__main__":
    key = jax.random.PRNGKey(0)

    # ------------------ test 1: small shapes, bf16 logits ------------------
    B, A, S, V = 2, 8, 8, 128
    k1, k2, k3, k4, k5, k6 = jax.random.split(key, 6)
    log_probs = -jax.nn.softplus(jax.random.normal(k1, (B, A), jnp.float32))
    old_log_probs = -jax.nn.softplus(jax.random.normal(k2, (B, A), jnp.float32))
    advantages = jax.random.normal(k3, (B, A), jnp.float32)
    action_mask = (jax.random.uniform(k4, (B, A)) > 0.25).astype(jnp.float32)
    action_mask = action_mask.at[:, 0].set(1.0)      # no empty mask rows
    lm_logits = jax.random.normal(k5, (B, S, V), jnp.float32).astype(jnp.bfloat16)
    lm_input_ids = jax.random.randint(k6, (B, S), 0, V, jnp.int32)
    pretrain_coef = 0.5

    cd = _select_compute_dtype(lm_logits.dtype)
    try:
        out = jax.block_until_ready(
            ppo_ptx_actor_loss(log_probs, old_log_probs, advantages, lm_logits,
                               lm_input_ids, action_mask,
                               policy_clip_eps=0.2, pretrain_coef=pretrain_coef,
                               compute_dtype=cd))
    except Exception:
        # graceful fallback if this Mosaic build lacks packed-bf16 reductions
        cd = jnp.float32
        out = jax.block_until_ready(
            ppo_ptx_actor_loss(log_probs, old_log_probs, advantages, lm_logits,
                               lm_input_ids, action_mask,
                               policy_clip_eps=0.2, pretrain_coef=pretrain_coef,
                               compute_dtype=cd))
    ref = _reference(log_probs, old_log_probs, advantages, lm_logits,
                     lm_input_ids, action_mask, clip_eps=0.2,
                     pretrain_coef=pretrain_coef)
    tol = 3e-2 if jnp.dtype(cd) == jnp.dtype(jnp.bfloat16) else 1e-4
    assert jnp.allclose(out, ref, atol=tol, rtol=tol), (out, ref)

    # ------ test 2: exercises sharding, vocab blocking, partial tiles ------
    B2, A2, S2, V2 = 2, 8, 31, 160
    j1, j2, j3, j4, j5, j6 = jax.random.split(jax.random.PRNGKey(1), 6)
    lp2 = -jax.nn.softplus(jax.random.normal(j1, (B2, A2), jnp.float32))
    olp2 = -jax.nn.softplus(jax.random.normal(j2, (B2, A2), jnp.float32))
    adv2 = jax.random.normal(j3, (B2, A2), jnp.float32)
    msk2 = (jax.random.uniform(j4, (B2, A2)) > 0.25).astype(jnp.float32)
    msk2 = msk2.at[:, 0].set(1.0)
    logits2 = jax.random.normal(j5, (B2, S2, V2), jnp.float32)
    ids2 = jax.random.randint(j6, (B2, S2), 0, V2, jnp.int32)

    out2 = jax.block_until_ready(
        ppo_ptx_actor_loss(lp2, olp2, adv2, logits2, ids2, msk2,
                           policy_clip_eps=0.2, pretrain_coef=0.3,
                           compute_dtype=jnp.float32, tile_t=16, tile_v=128))
    ref2 = _reference(lp2, olp2, adv2, logits2, ids2, msk2,
                      clip_eps=0.2, pretrain_coef=0.3)
    assert jnp.allclose(out2, ref2, atol=1e-4, rtol=1e-4), (out2, ref2)

    print("KERNEL_OK")
</pallas_src>

<mosaic_0001>
module attributes {stable_mosaic.version = 11 : i64} {
  func.func @_ppo_ptx_kernel(%arg0: i32, %arg1: i32, %arg2: i32, %arg3: memref<2x8xf32, #tpu.memory_space<vmem>>, %arg4: memref<2x8xf32, #tpu.memory_space<vmem>>, %arg5: memref<2x8xf32, #tpu.memory_space<vmem>>, %arg6: memref<2x8xf32, #tpu.memory_space<vmem>>, %arg7: memref<16x128xbf16, #tpu.memory_space<vmem>>, %arg8: memref<16x1xi32, #tpu.memory_space<vmem>>, %arg9: memref<8x128xf32, #tpu.memory_space<vmem>>, %arg10: memref<16x1xf32, #tpu.memory_space<vmem>>, %arg11: memref<16x1xf32, #tpu.memory_space<vmem>>, %arg12: memref<16x1xf32, #tpu.memory_space<vmem>>, %arg13: memref<16x1xf32, #tpu.memory_space<vmem>>, %arg14: memref<16x1xf32, #tpu.memory_space<vmem>>) attributes {dimension_semantics = [#tpu.dimension_semantics<parallel>, #tpu.dimension_semantics<arbitrary>, #tpu.dimension_semantics<arbitrary>], iteration_bounds = array<i64: 1, 1, 1>, scalar_prefetch = 0 : i64, scratch_operands = 5 : i64, tpu.core_type = #tpu.core_type<tc>, window_params = [{pipeline_mode = #tpu.pipeline_mode<synchronous>, transform_indices = @transform_0, window_bounds = array<i64: 2, 8>}, {pipeline_mode = #tpu.pipeline_mode<synchronous>, transform_indices = @transform_1, window_bounds = array<i64: 2, 8>}, {pipeline_mode = #tpu.pipeline_mode<synchronous>, transform_indices = @transform_2, window_bounds = array<i64: 2, 8>}, {pipeline_mode = #tpu.pipeline_mode<synchronous>, transform_indices = @transform_3, window_bounds = array<i64: 2, 8>}, {transform_indices = @transform_4, window_bounds = array<i64: 16, 128>}, {transform_indices = @transform_5, window_bounds = array<i64: 16, 1>}, {transform_indices = @transform_6, window_bounds = array<i64: 8, 128>}]} {
    %c0_i32 = arith.constant 0 : i32
    %0 = arith.cmpi eq, %arg1, %c0_i32 : i32
    %c0_i32_0 = arith.constant 0 : i32
    %1 = arith.cmpi eq, %arg2, %c0_i32_0 : i32
    %2 = arith.andi %0, %1 : i1
    %3 = arith.extui %2 : i1 to i32
    %c0_i32_1 = arith.constant 0 : i32
    %4 = arith.cmpi ne, %3, %c0_i32_1 : i32
    scf.if %4 {
      %cst_29 = arith.constant 0.000000e+00 : f32
      %53 = vector.broadcast %cst_29 : f32 to vector<16x1xf32>
      %c0_30 = arith.constant 0 : index
      %c0_31 = arith.constant 0 : index
      %54 = vector.load %arg13[%c0_30, %c0_31] : memref<16x1xf32, #tpu.memory_space<vmem>>, vector<16x1xf32>
      tpu.vector_store %arg13[%c0_30, %c0_31], %53 {strides = array<i32>} : memref<16x1xf32, #tpu.memory_space<vmem>>, vector<16x1xf32>,
      %cst_32 = arith.constant 0.000000e+00 : f32
      %55 = vector.broadcast %cst_32 : f32 to vector<16x1xf32>
      %c0_33 = arith.constant 0 : index
      %c0_34 = arith.constant 0 : index
      %56 = vector.load %arg14[%c0_33, %c0_34] : memref<16x1xf32, #tpu.memory_space<vmem>>, vector<16x1xf32>
      tpu.vector_store %arg14[%c0_33, %c0_34], %55 {strides = array<i32>} : memref<16x1xf32, #tpu.memory_space<vmem>>, vector<16x1xf32>,
    } else {
    }
    %c0_i32_2 = arith.constant 0 : i32
    %5 = arith.cmpi eq, %arg2, %c0_i32_2 : i32
    %6 = arith.extui %5 : i1 to i32
    %c0_i32_3 = arith.constant 0 : i32
    %7 = arith.cmpi ne, %6, %c0_i32_3 : i32
    scf.if %7 {
      %cst_29 = arith.constant 0xFF800000 : f32
      %53 = vector.broadcast %cst_29 : f32 to vector<16x1xf32>
      %c0_30 = arith.constant 0 : index
      %c0_31 = arith.constant 0 : index
      %54 = vector.load %arg10[%c0_30, %c0_31] : memref<16x1xf32, #tpu.memory_space<vmem>>, vector<16x1xf32>
      tpu.vector_store %arg10[%c0_30, %c0_31], %53 {strides = array<i32>} : memref<16x1xf32, #tpu.memory_space<vmem>>, vector<16x1xf32>,
      %cst_32 = arith.constant 0.000000e+00 : f32
      %55 = vector.broadcast %cst_32 : f32 to vector<16x1xf32>
      %c0_33 = arith.constant 0 : index
      %c0_34 = arith.constant 0 : index
      %56 = vector.load %arg11[%c0_33, %c0_34] : memref<16x1xf32, #tpu.memory_space<vmem>>, vector<16x1xf32>
      tpu.vector_store %arg11[%c0_33, %c0_34], %55 {strides = array<i32>} : memref<16x1xf32, #tpu.memory_space<vmem>>, vector<16x1xf32>,
      %cst_35 = arith.constant 0.000000e+00 : f32
      %57 = vector.broadcast %cst_35 : f32 to vector<16x1xf32>
      %c0_36 = arith.constant 0 : index
      %c0_37 = arith.constant 0 : index
      %58 = vector.load %arg12[%c0_36, %c0_37] : memref<16x1xf32, #tpu.memory_space<vmem>>, vector<16x1xf32>
      tpu.vector_store %arg12[%c0_36, %c0_37], %57 {strides = array<i32>} : memref<16x1xf32, #tpu.memory_space<vmem>>, vector<16x1xf32>,
    } else {
    }
    %c0 = arith.constant 0 : index
    %c0_4 = arith.constant 0 : index
    %8 = vector.load %arg7[%c0, %c0_4] : memref<16x128xbf16, #tpu.memory_space<vmem>>, vector<16x128xbf16>
    %9 = arith.extf %8 : vector<16x128xbf16> to vector<16x128xf32>
    %c0_5 = arith.constant 0 : index
    %c0_6 = arith.constant 0 : index
    %10 = vector.load %arg8[%c0_5, %c0_6] : memref<16x1xi32, #tpu.memory_space<vmem>>, vector<16x1xi32>
    %11 = tpu.iota {dimensions = array<i32: 1>} : vector<1x128xi32>
    %c128_i32 = arith.constant 128 : i32
    %12 = arith.muli %arg2, %c128_i32 : i32
    %13 = vector.broadcast %12 : i32 to vector<1x128xi32>
    %14 = arith.addi %11, %13 : vector<1x128xi32>
    %cst = arith.constant dense<0xFF800000> : vector<16xf32>
    %15 = vector.multi_reduction <maximumf>, %9, %cst [1] : vector<16x128xf32> to vector<16xf32>
    %16 = vector.shape_cast %15 : vector<16xf32> to vector<16x1xf32>
    %17 = vector.broadcast %16 : vector<16x1xf32> to vector<16x128xf32>
    %18 = arith.subf %9, %17 : vector<16x128xf32>
    %19 = math.exp %18 : vector<16x128xf32>
    %cst_7 = arith.constant dense<0.000000e+00> : vector<16xf32>
    %20 = vector.multi_reduction <add>, %19, %cst_7 [1] : vector<16x128xf32> to vector<16xf32>
    %21 = vector.shape_cast %20 : vector<16xf32> to vector<16x1xf32>
    %22 = vector.broadcast %14 : vector<1x128xi32> to vector<16x128xi32>
    %23 = vector.broadcast %10 : vector<16x1xi32> to vector<16x128xi32>
    %24 = arith.cmpi eq, %22, %23 : vector<16x128xi32>
    %cst_8 = arith.constant 0.000000e+00 : f32
    %25 = vector.broadcast %cst_8 : f32 to vector<16x128xf32>
    %26 = arith.select %24, %9, %25 : vector<16x128xi1>, vector<16x128xf32>
    %cst_9 = arith.constant dense<0.000000e+00> : vector<16xf32>
    %27 = vector.multi_reduction <add>, %26, %cst_9 [1] : vector<16x128xf32> to vector<16xf32>
    %28 = vector.shape_cast %27 : vector<16xf32> to vector<16x1xf32>
    %c0_10 = arith.constant 0 : index
    %c0_11 = arith.constant 0 : index
    %29 = vector.load %arg10[%c0_10, %c0_11] : memref<16x1xf32, #tpu.memory_space<vmem>>, vector<16x1xf32>
    %30 = arith.maximumf %29, %16 : vector<16x1xf32>
    %c0_12 = arith.constant 0 : index
    %c0_13 = arith.constant 0 : index
    %31 = vector.load %arg11[%c0_12, %c0_13] : memref<16x1xf32, #tpu.memory_space<vmem>>, vector<16x1xf32>
    %c0_14 = arith.constant 0 : index
    %c0_15 = arith.constant 0 : index
    %32 = vector.load %arg10[%c0_14, %c0_15] : memref<16x1xf32, #tpu.memory_space<vmem>>, vector<16x1xf32>
    %33 = arith.subf %32, %30 : vector<16x1xf32>
    %34 = math.exp %33 : vector<16x1xf32>
    %35 = arith.mulf %31, %34 : vector<16x1xf32>
    %36 = arith.subf %16, %30 : vector<16x1xf32>
    %37 = math.exp %36 : vector<16x1xf32>
    %38 = arith.mulf %21, %37 : vector<16x1xf32>
    %39 = arith.addf %35, %38 : vector<16x1xf32>
    %c0_16 = arith.constant 0 : index
    %c0_17 = arith.constant 0 : index
    %40 = vector.load %arg11[%c0_16, %c0_17] : memref<16x1xf32, #tpu.memory_space<vmem>>, vector<16x1xf32>
    tpu.vector_store %arg11[%c0_16, %c0_17], %39 {strides = array<i32>} : memref<16x1xf32, #tpu.memory_space<vmem>>, vector<16x1xf32>,
    %c0_18 = arith.constant 0 : index
    %c0_19 = arith.constant 0 : index
    %41 = vector.load %arg12[%c0_18, %c0_19] : memref<16x1xf32, #tpu.memory_space<vmem>>, vector<16x1xf32>
    %42 = arith.addf %41, %28 : vector<16x1xf32>
    %c0_20 = arith.constant 0 : index
    %c0_21 = arith.constant 0 : index
    %43 = vector.load %arg12[%c0_20, %c0_21] : memref<16x1xf32, #tpu.memory_space<vmem>>, vector<16x1xf32>
    tpu.vector_store %arg12[%c0_20, %c0_21], %42 {strides = array<i32>} : memref<16x1xf32, #tpu.memory_space<vmem>>, vector<16x1xf32>,
    %c0_22 = arith.constant 0 : index
    %c0_23 = arith.constant 0 : index
    %44 = vector.load %arg10[%c0_22, %c0_23] : memref<16x1xf32, #tpu.memory_space<vmem>>, vector<16x1xf32>
    tpu.vector_store %arg10[%c0_22, %c0_23], %30 {strides = array<i32>} : memref<16x1xf32, #tpu.memory_space<vmem>>, vector<16x1xf32>,
    %c0_i32_24 = arith.constant 0 : i32
    %45 = arith.cmpi eq, %arg2, %c0_i32_24 : i32
    %46 = arith.extui %45 : i1 to i32
    %c0_i32_25 = arith.constant 0 : i32
    %47 = arith.cmpi ne, %46, %c0_i32_25 : i32
    scf.if %47 {
      %c0_29 = arith.constant 0 : index
      %c0_30 = arith.constant 0 : index
      %53 = vector.load %arg11[%c0_29, %c0_30] : memref<16x1xf32, #tpu.memory_space<vmem>>, vector<16x1xf32>
      %54 = math.log %53 : vector<16x1xf32>
      %c0_31 = arith.constant 0 : index
      %c0_32 = arith.constant 0 : index
      %55 = vector.load %arg10[%c0_31, %c0_32] : memref<16x1xf32, #tpu.memory_space<vmem>>, vector<16x1xf32>
      %56 = arith.addf %54, %55 : vector<16x1xf32>
      %c-100_i32 = arith.constant -100 : i32
      %57 = vector.broadcast %c-100_i32 : i32 to vector<16x1xi32>
      %58 = arith.cmpi ne, %10, %57 : vector<16x1xi32>
      %c0_33 = arith.constant 0 : index
      %c0_34 = arith.constant 0 : index
      %59 = vector.load %arg13[%c0_33, %c0_34] : memref<16x1xf32, #tpu.memory_space<vmem>>, vector<16x1xf32>
      %c0_35 = arith.constant 0 : index
      %c0_36 = arith.constant 0 : index
      %60 = vector.load %arg12[%c0_35, %c0_36] : memref<16x1xf32, #tpu.memory_space<vmem>>, vector<16x1xf32>
      %61 = arith.subf %56, %60 : vector<16x1xf32>
      %cst_37 = arith.constant 0.000000e+00 : f32
      %62 = vector.broadcast %cst_37 : f32 to vector<16x1xf32>
      %63 = arith.select %58, %61, %62 : vector<16x1xi1>, vector<16x1xf32>
      %64 = arith.addf %59, %63 : vector<16x1xf32>
      %c0_38 = arith.constant 0 : index
      %c0_39 = arith.constant 0 : index
      %65 = vector.load %arg13[%c0_38, %c0_39] : memref<16x1xf32, #tpu.memory_space<vmem>>, vector<16x1xf32>
      tpu.vector_store %arg13[%c0_38, %c0_39], %64 {strides = array<i32>} : memref<16x1xf32, #tpu.memory_space<vmem>>, vector<16x1xf32>,
      %c0_40 = arith.constant 0 : index
      %c0_41 = arith.constant 0 : index
      %66 = vector.load %arg14[%c0_40, %c0_41] : memref<16x1xf32, #tpu.memory_space<vmem>>, vector<16x1xf32>
      %67 = arith.extui %58 : vector<16x1xi1> to vector<16x1xi32>
      %68 = arith.sitofp %67 : vector<16x1xi32> to vector<16x1xf32>
      %69 = arith.addf %66, %68 : vector<16x1xf32>
      %c0_42 = arith.constant 0 : index
      %c0_43 = arith.constant 0 : index
      %70 = vector.load %arg14[%c0_42, %c0_43] : memref<16x1xf32, #tpu.memory_space<vmem>>, vector<16x1xf32>
      tpu.vector_store %arg14[%c0_42, %c0_43], %69 {strides = array<i32>} : memref<16x1xf32, #tpu.memory_space<vmem>>, vector<16x1xf32>,
    } else {
    }
    %c0_i32_26 = arith.constant 0 : i32
    %48 = arith.cmpi eq, %arg1, %c0_i32_26 : i32
    %c0_i32_27 = arith.constant 0 : i32
    %49 = arith.cmpi eq, %arg2, %c0_i32_27 : i32
    %50 = arith.andi %48, %49 : i1
    %51 = arith.extui %50 : i1 to i32
    %c0_i32_28 = arith.constant 0 : i32
    %52 = arith.cmpi ne, %51, %c0_i32_28 : i32
    scf.if %52 {
      %c0_29 = arith.constant 0 : index
      %c0_30 = arith.constant 0 : index
      %53 = vector.load %arg3[%c0_29, %c0_30] : memref<2x8xf32, #tpu.memory_space<vmem>>, vector<2x8xf32>
      %c0_31 = arith.constant 0 : index
      %c0_32 = arith.constant 0 : index
      %54 = vector.load %arg4[%c0_31, %c0_32] : memref<2x8xf32, #tpu.memory_space<vmem>>, vector<2x8xf32>
      %c0_33 = arith.constant 0 : index
      %c0_34 = arith.constant 0 : index
      %55 = vector.load %arg5[%c0_33, %c0_34] : memref<2x8xf32, #tpu.memory_space<vmem>>, vector<2x8xf32>
      %c0_35 = arith.constant 0 : index
      %c0_36 = arith.constant 0 : index
      %56 = vector.load %arg6[%c0_35, %c0_36] : memref<2x8xf32, #tpu.memory_space<vmem>>, vector<2x8xf32>
      %57 = arith.subf %53, %54 : vector<2x8xf32>
      %58 = math.exp %57 : vector<2x8xf32>
      %59 = arith.mulf %58, %55 : vector<2x8xf32>
      %cst_37 = arith.constant 8.000000e-01 : f32
      %cst_38 = arith.constant 1.200000e+00 : f32
      %60 = vector.broadcast %cst_37 : f32 to vector<2x8xf32>
      %61 = arith.maximumf %60, %58 : vector<2x8xf32>
      %62 = vector.broadcast %cst_38 : f32 to vector<2x8xf32>
      %63 = arith.minimumf %62, %61 : vector<2x8xf32>
      %64 = arith.mulf %63, %55 : vector<2x8xf32>
      %65 = arith.minimumf %59, %64 : vector<2x8xf32>
      %cst_39 = arith.constant 0.000000e+00 : f32
      %66 = vector.broadcast %cst_39 : f32 to vector<2x8xf32>
      %67 = arith.subf %66, %65 : vector<2x8xf32>
      %68 = arith.mulf %67, %56 : vector<2x8xf32>
      %cst_40 = arith.constant dense<0.000000e+00> : vector<2xf32>
      %69 = vector.multi_reduction <add>, %68, %cst_40 [1] : vector<2x8xf32> to vector<2xf32>
      %70 = vector.shape_cast %69 : vector<2xf32> to vector<2x1xf32>
      %cst_41 = arith.constant dense<0.000000e+00> : vector<2xf32>
      %71 = vector.multi_reduction <add>, %56, %cst_41 [1] : vector<2x8xf32> to vector<2xf32>
      %72 = vector.shape_cast %71 : vector<2xf32> to vector<2x1xf32>
      %73 = arith.divf %70, %72 : vector<2x1xf32>
      %74 = vector.shape_cast %73 : vector<2x1xf32> to vector<1x2x1xf32>
      %cst_42 = arith.constant dense<0.000000e+00> : vector<1xf32>
      %75 = vector.multi_reduction <add>, %74, %cst_42 [1, 2] : vector<1x2x1xf32> to vector<1xf32>
      %76 = vector.shape_cast %75 : vector<1xf32> to vector<1x1x1xf32>
      %77 = vector.extract %76[0, 0, 0] : f32 from vector<1x1x1xf32>
      %cst_43 = arith.constant 2.000000e+00 : f32
      %78 = arith.divf %77, %cst_43 : f32
      %c0_44 = arith.constant 0 : index
      %c0_45 = arith.constant 0 : index
      %79 = vector.load %arg13[%c0_44, %c0_45] : memref<16x1xf32, #tpu.memory_space<vmem>>, vector<16x1xf32>
      %80 = vector.shape_cast %79 : vector<16x1xf32> to vector<1x16x1xf32>
      %cst_46 = arith.constant dense<0.000000e+00> : vector<1xf32>
      %81 = vector.multi_reduction <add>, %80, %cst_46 [1, 2] : vector<1x16x1xf32> to vector<1xf32>
      %82 = vector.shape_cast %81 : vector<1xf32> to vector<1x1x1xf32>
      %83 = vector.extract %82[0, 0, 0] : f32 from vector<1x1x1xf32>
      %c0_47 = arith.constant 0 : index
      %c0_48 = arith.constant 0 : index
      %84 = vector.load %arg14[%c0_47, %c0_48] : memref<16x1xf32, #tpu.memory_space<vmem>>, vector<16x1xf32>
      %85 = vector.shape_cast %84 : vector<16x1xf32> to vector<1x16x1xf32>
      %cst_49 = arith.constant dense<0.000000e+00> : vector<1xf32>
      %86 = vector.multi_reduction <add>, %85, %cst_49 [1, 2] : vector<1x16x1xf32> to vector<1xf32>
      %87 = vector.shape_cast %86 : vector<1xf32> to vector<1x1x1xf32>
      %88 = vector.extract %87[0, 0, 0] : f32 from vector<1x1x1xf32>
      %89 = tpu.iota {dimensions = array<i32: 1>} : vector<8x128xi32>
      %90 = tpu.iota {dimensions = array<i32: 0>} : vector<8x128xi32>
      %c0_i32_50 = arith.constant 0 : i32
      %91 = vector.broadcast %c0_i32_50 : i32 to vector<8x128xi32>
      %92 = arith.cmpi eq, %90, %91 : vector<8x128xi32>
      %c0_i32_51 = arith.constant 0 : i32
      %93 = vector.broadcast %c0_i32_51 : i32 to vector<8x128xi32>
      %94 = arith.cmpi eq, %89, %93 : vector<8x128xi32>
      %95 = arith.andi %92, %94 : vector<8x128xi1>
      %cst_52 = arith.constant 0.000000e+00 : f32
      %96 = vector.broadcast %83 : f32 to vector<8x128xf32>
      %97 = vector.broadcast %cst_52 : f32 to vector<8x128xf32>
      %98 = arith.select %95, %96, %97 : vector<8x128xi1>, vector<8x128xf32>
      %c0_i32_53 = arith.constant 0 : i32
      %99 = vector.broadcast %c0_i32_53 : i32 to vector<8x128xi32>
      %100 = arith.cmpi eq, %90, %99 : vector<8x128xi32>
      %c1_i32 = arith.constant 1 : i32
      %101 = vector.broadcast %c1_i32 : i32 to vector<8x128xi32>
      %102 = arith.cmpi eq, %89, %101 : vector<8x128xi32>
      %103 = arith.andi %100, %102 : vector<8x128xi1>
      %104 = vector.broadcast %88 : f32 to vector<8x128xf32>
      %105 = arith.select %103, %104, %98 : vector<8x128xi1>, vector<8x128xf32>
      %c0_i32_54 = arith.constant 0 : i32
      %106 = vector.broadcast %c0_i32_54 : i32 to vector<8x128xi32>
      %107 = arith.cmpi eq, %90, %106 : vector<8x128xi32>
      %c2_i32 = arith.constant 2 : i32
      %108 = vector.broadcast %c2_i32 : i32 to vector<8x128xi32>
      %109 = arith.cmpi eq, %89, %108 : vector<8x128xi32>
      %110 = arith.andi %107, %109 : vector<8x128xi1>
      %111 = vector.broadcast %78 : f32 to vector<8x128xf32>
      %112 = arith.select %110, %111, %105 : vector<8x128xi1>, vector<8x128xf32>
      %c0_55 = arith.constant 0 : index
      %c0_56 = arith.constant 0 : index
      %113 = vector.load %arg9[%c0_55, %c0_56] : memref<8x128xf32, #tpu.memory_space<vmem>>, vector<8x128xf32>
      tpu.vector_store %arg9[%c0_55, %c0_56], %112 {strides = array<i32>} : memref<8x128xf32, #tpu.memory_space<vmem>>, vector<8x128xf32>,
    } else {
    }
    return
  }
  func.func @transform_0(%arg0: i32, %arg1: i32, %arg2: i32) -> (i32, i32) {
    %c0_i32 = arith.constant 0 : i32
    %c0_i32_0 = arith.constant 0 : i32
    %c0_i32_1 = arith.constant 0 : i32
    return %c0_i32, %c0_i32_0 : i32, i32
  }
  func.func @transform_1(%arg0: i32, %arg1: i32, %arg2: i32) -> (i32, i32) {
    %c0_i32 = arith.constant 0 : i32
    %c0_i32_0 = arith.constant 0 : i32
    %c0_i32_1 = arith.constant 0 : i32
    return %c0_i32, %c0_i32_0 : i32, i32
  }
  func.func @transform_2(%arg0: i32, %arg1: i32, %arg2: i32) -> (i32, i32) {
    %c0_i32 = arith.constant 0 : i32
    %c0_i32_0 = arith.constant 0 : i32
    %c0_i32_1 = arith.constant 0 : i32
    return %c0_i32, %c0_i32_0 : i32, i32
  }
  func.func @transform_3(%arg0: i32, %arg1: i32, %arg2: i32) -> (i32, i32) {
    %c0_i32 = arith.constant 0 : i32
    %c0_i32_0 = arith.constant 0 : i32
    %c0_i32_1 = arith.constant 0 : i32
    return %c0_i32, %c0_i32_0 : i32, i32
  }
  func.func @transform_4(%arg0: i32, %arg1: i32, %arg2: i32) -> (i32, i32) {
    %c1_i32 = arith.constant 1 : i32
    %0 = arith.muli %arg0, %c1_i32 : i32
    %1 = arith.addi %0, %arg1 : i32
    %c0_i32 = arith.constant 0 : i32
    return %1, %arg2 : i32, i32
  }
  func.func @transform_5(%arg0: i32, %arg1: i32, %arg2: i32) -> (i32, i32) {
    %c1_i32 = arith.constant 1 : i32
    %0 = arith.muli %arg0, %c1_i32 : i32
    %1 = arith.addi %0, %arg1 : i32
    %c0_i32 = arith.constant 0 : i32
    %c0_i32_0 = arith.constant 0 : i32
    return %1, %c0_i32 : i32, i32
  }
  func.func @transform_6(%arg0: i32, %arg1: i32, %arg2: i32) -> (i32, i32) {
    %c0_i32 = arith.constant 0 : i32
    %c0_i32_0 = arith.constant 0 : i32
    return %arg0, %c0_i32 : i32, i32
  }
}

module attributes {stable_mosaic.version = 11 : i64} {
  func.func @_ppo_ptx_kernel(%arg0: i32, %arg1: i32, %arg2: i32, %arg3: memref<2x8xf32, #tpu.memory_space<vmem>>, %arg4: memref<2x8xf32, #tpu.memory_space<vmem>>, %arg5: memref<2x8xf32, #tpu.memory_space<vmem>>, %arg6: memref<2x8xf32, #tpu.memory_space<vmem>>, %arg7: memref<16x128xbf16, #tpu.memory_space<vmem>>, %arg8: memref<16x1xi32, #tpu.memory_space<vmem>>, %arg9: memref<8x128xf32, #tpu.memory_space<vmem>>, %arg10: memref<16x1xf32, #tpu.memory_space<vmem>>, %arg11: memref<16x1xf32, #tpu.memory_space<vmem>>, %arg12: memref<16x1xf32, #tpu.memory_space<vmem>>, %arg13: memref<16x1xf32, #tpu.memory_space<vmem>>, %arg14: memref<16x1xf32, #tpu.memory_space<vmem>>) attributes {dimension_semantics = [#tpu.dimension_semantics<parallel>, #tpu.dimension_semantics<arbitrary>, #tpu.dimension_semantics<arbitrary>], iteration_bounds = array<i64: 1, 1, 1>, scalar_prefetch = 0 : i64, scratch_operands = 5 : i64, tpu.core_type = #tpu.core_type<tc>, window_params = [{pipeline_mode = #tpu.pipeline_mode<synchronous>, transform_indices = @transform_0, window_bounds = array<i64: 2, 8>}, {pipeline_mode = #tpu.pipeline_mode<synchronous>, transform_indices = @transform_1, window_bounds = array<i64: 2, 8>}, {pipeline_mode = #tpu.pipeline_mode<synchronous>, transform_indices = @transform_2, window_bounds = array<i64: 2, 8>}, {pipeline_mode = #tpu.pipeline_mode<synchronous>, transform_indices = @transform_3, window_bounds = array<i64: 2, 8>}, {transform_indices = @transform_4, window_bounds = array<i64: 16, 128>}, {transform_indices = @transform_5, window_bounds = array<i64: 16, 1>}, {transform_indices = @transform_6, window_bounds = array<i64: 8, 128>}]} {
    %c0_i32 = arith.constant 0 : i32
    %0 = arith.cmpi eq, %arg1, %c0_i32 : i32
    %c0_i32_0 = arith.constant 0 : i32
    %1 = arith.cmpi eq, %arg2, %c0_i32_0 : i32
    %2 = arith.andi %0, %1 : i1
    %3 = arith.extui %2 : i1 to i32
    %c0_i32_1 = arith.constant 0 : i32
    %4 = arith.cmpi ne, %3, %c0_i32_1 : i32
    scf.if %4 {
      %cst_29 = arith.constant 0.000000e+00 : f32
      %53 = vector.broadcast %cst_29 : f32 to vector<16x1xf32>
      %c0_30 = arith.constant 0 : index
      %c0_31 = arith.constant 0 : index
      %54 = vector.load %arg13[%c0_30, %c0_31] : memref<16x1xf32, #tpu.memory_space<vmem>>, vector<16x1xf32>
      tpu.vector_store %arg13[%c0_30, %c0_31], %53 {strides = array<i32>} : memref<16x1xf32, #tpu.memory_space<vmem>>, vector<16x1xf32>,
      %cst_32 = arith.constant 0.000000e+00 : f32
      %55 = vector.broadcast %cst_32 : f32 to vector<16x1xf32>
      %c0_33 = arith.constant 0 : index
      %c0_34 = arith.constant 0 : index
      %56 = vector.load %arg14[%c0_33, %c0_34] : memref<16x1xf32, #tpu.memory_space<vmem>>, vector<16x1xf32>
      tpu.vector_store %arg14[%c0_33, %c0_34], %55 {strides = array<i32>} : memref<16x1xf32, #tpu.memory_space<vmem>>, vector<16x1xf32>,
    } else {
    }
    %c0_i32_2 = arith.constant 0 : i32
    %5 = arith.cmpi eq, %arg2, %c0_i32_2 : i32
    %6 = arith.extui %5 : i1 to i32
    %c0_i32_3 = arith.constant 0 : i32
    %7 = arith.cmpi ne, %6, %c0_i32_3 : i32
    scf.if %7 {
      %cst_29 = arith.constant 0xFF800000 : f32
      %53 = vector.broadcast %cst_29 : f32 to vector<16x1xf32>
      %c0_30 = arith.constant 0 : index
      %c0_31 = arith.constant 0 : index
      %54 = vector.load %arg10[%c0_30, %c0_31] : memref<16x1xf32, #tpu.memory_space<vmem>>, vector<16x1xf32>
      tpu.vector_store %arg10[%c0_30, %c0_31], %53 {strides = array<i32>} : memref<16x1xf32, #tpu.memory_space<vmem>>, vector<16x1xf32>,
      %cst_32 = arith.constant 0.000000e+00 : f32
      %55 = vector.broadcast %cst_32 : f32 to vector<16x1xf32>
      %c0_33 = arith.constant 0 : index
      %c0_34 = arith.constant 0 : index
      %56 = vector.load %arg11[%c0_33, %c0_34] : memref<16x1xf32, #tpu.memory_space<vmem>>, vector<16x1xf32>
      tpu.vector_store %arg11[%c0_33, %c0_34], %55 {strides = array<i32>} : memref<16x1xf32, #tpu.memory_space<vmem>>, vector<16x1xf32>,
      %cst_35 = arith.constant 0.000000e+00 : f32
      %57 = vector.broadcast %cst_35 : f32 to vector<16x1xf32>
      %c0_36 = arith.constant 0 : index
      %c0_37 = arith.constant 0 : index
      %58 = vector.load %arg12[%c0_36, %c0_37] : memref<16x1xf32, #tpu.memory_space<vmem>>, vector<16x1xf32>
      tpu.vector_store %arg12[%c0_36, %c0_37], %57 {strides = array<i32>} : memref<16x1xf32, #tpu.memory_space<vmem>>, vector<16x1xf32>,
    } else {
    }
    %c0 = arith.constant 0 : index
    %c0_4 = arith.constant 0 : index
    %8 = vector.load %arg7[%c0, %c0_4] : memref<16x128xbf16, #tpu.memory_space<vmem>>, vector<16x128xbf16>
    %9 = arith.extf %8 : vector<16x128xbf16> to vector<16x128xf32>
    %c0_5 = arith.constant 0 : index
    %c0_6 = arith.constant 0 : index
    %10 = vector.load %arg8[%c0_5, %c0_6] : memref<16x1xi32, #tpu.memory_space<vmem>>, vector<16x1xi32>
    %11 = tpu.iota {dimensions = array<i32: 1>} : vector<1x128xi32>
    %c128_i32 = arith.constant 128 : i32
    %12 = arith.muli %arg2, %c128_i32 : i32
    %13 = vector.broadcast %12 : i32 to vector<1x128xi32>
    %14 = arith.addi %11, %13 : vector<1x128xi32>
    %cst = arith.constant dense<0xFF800000> : vector<16xf32>
    %15 = vector.multi_reduction <maximumf>, %9, %cst [1] : vector<16x128xf32> to vector<16xf32>
    %16 = vector.shape_cast %15 : vector<16xf32> to vector<16x1xf32>
    %17 = vector.broadcast %16 : vector<16x1xf32> to vector<16x128xf32>
    %18 = arith.subf %9, %17 : vector<16x128xf32>
    %19 = math.exp %18 : vector<16x128xf32>
    %cst_7 = arith.constant dense<0.000000e+00> : vector<16xf32>
    %20 = vector.multi_reduction <add>, %19, %cst_7 [1] : vector<16x128xf32> to vector<16xf32>
    %21 = vector.shape_cast %20 : vector<16xf32> to vector<16x1xf32>
    %22 = vector.broadcast %14 : vector<1x128xi32> to vector<16x128xi32>
    %23 = vector.broadcast %10 : vector<16x1xi32> to vector<16x128xi32>
    %24 = arith.cmpi eq, %22, %23 : vector<16x128xi32>
    %cst_8 = arith.constant 0.000000e+00 : f32
    %25 = vector.broadcast %cst_8 : f32 to vector<16x128xf32>
    %26 = arith.select %24, %9, %25 : vector<16x128xi1>, vector<16x128xf32>
    %cst_9 = arith.constant dense<0.000000e+00> : vector<16xf32>
    %27 = vector.multi_reduction <add>, %26, %cst_9 [1] : vector<16x128xf32> to vector<16xf32>
    %28 = vector.shape_cast %27 : vector<16xf32> to vector<16x1xf32>
    %c0_10 = arith.constant 0 : index
    %c0_11 = arith.constant 0 : index
    %29 = vector.load %arg10[%c0_10, %c0_11] : memref<16x1xf32, #tpu.memory_space<vmem>>, vector<16x1xf32>
    %30 = arith.maximumf %29, %16 : vector<16x1xf32>
    %c0_12 = arith.constant 0 : index
    %c0_13 = arith.constant 0 : index
    %31 = vector.load %arg11[%c0_12, %c0_13] : memref<16x1xf32, #tpu.memory_space<vmem>>, vector<16x1xf32>
    %c0_14 = arith.constant 0 : index
    %c0_15 = arith.constant 0 : index
    %32 = vector.load %arg10[%c0_14, %c0_15] : memref<16x1xf32, #tpu.memory_space<vmem>>, vector<16x1xf32>
    %33 = arith.subf %32, %30 : vector<16x1xf32>
    %34 = math.exp %33 : vector<16x1xf32>
    %35 = arith.mulf %31, %34 : vector<16x1xf32>
    %36 = arith.subf %16, %30 : vector<16x1xf32>
    %37 = math.exp %36 : vector<16x1xf32>
    %38 = arith.mulf %21, %37 : vector<16x1xf32>
    %39 = arith.addf %35, %38 : vector<16x1xf32>
    %c0_16 = arith.constant 0 : index
    %c0_17 = arith.constant 0 : index
    %40 = vector.load %arg11[%c0_16, %c0_17] : memref<16x1xf32, #tpu.memory_space<vmem>>, vector<16x1xf32>
    tpu.vector_store %arg11[%c0_16, %c0_17], %39 {strides = array<i32>} : memref<16x1xf32, #tpu.memory_space<vmem>>, vector<16x1xf32>,
    %c0_18 = arith.constant 0 : index
    %c0_19 = arith.constant 0 : index
    %41 = vector.load %arg12[%c0_18, %c0_19] : memref<16x1xf32, #tpu.memory_space<vmem>>, vector<16x1xf32>
    %42 = arith.addf %41, %28 : vector<16x1xf32>
    %c0_20 = arith.constant 0 : index
    %c0_21 = arith.constant 0 : index
    %43 = vector.load %arg12[%c0_20, %c0_21] : memref<16x1xf32, #tpu.memory_space<vmem>>, vector<16x1xf32>
    tpu.vector_store %arg12[%c0_20, %c0_21], %42 {strides = array<i32>} : memref<16x1xf32, #tpu.memory_space<vmem>>, vector<16x1xf32>,
    %c0_22 = arith.constant 0 : index
    %c0_23 = arith.constant 0 : index
    %44 = vector.load %arg10[%c0_22, %c0_23] : memref<16x1xf32, #tpu.memory_space<vmem>>, vector<16x1xf32>
    tpu.vector_store %arg10[%c0_22, %c0_23], %30 {strides = array<i32>} : memref<16x1xf32, #tpu.memory_space<vmem>>, vector<16x1xf32>,
    %c0_i32_24 = arith.constant 0 : i32
    %45 = arith.cmpi eq, %arg2, %c0_i32_24 : i32
    %46 = arith.extui %45 : i1 to i32
    %c0_i32_25 = arith.constant 0 : i32
    %47 = arith.cmpi ne, %46, %c0_i32_25 : i32
    scf.if %47 {
      %c0_29 = arith.constant 0 : index
      %c0_30 = arith.constant 0 : index
      %53 = vector.load %arg11[%c0_29, %c0_30] : memref<16x1xf32, #tpu.memory_space<vmem>>, vector<16x1xf32>
      %54 = math.log %53 : vector<16x1xf32>
      %c0_31 = arith.constant 0 : index
      %c0_32 = arith.constant 0 : index
      %55 = vector.load %arg10[%c0_31, %c0_32] : memref<16x1xf32, #tpu.memory_space<vmem>>, vector<16x1xf32>
      %56 = arith.addf %54, %55 : vector<16x1xf32>
      %c-100_i32 = arith.constant -100 : i32
      %57 = vector.broadcast %c-100_i32 : i32 to vector<16x1xi32>
      %58 = arith.cmpi ne, %10, %57 : vector<16x1xi32>
      %c0_33 = arith.constant 0 : index
      %c0_34 = arith.constant 0 : index
      %59 = vector.load %arg13[%c0_33, %c0_34] : memref<16x1xf32, #tpu.memory_space<vmem>>, vector<16x1xf32>
      %c0_35 = arith.constant 0 : index
      %c0_36 = arith.constant 0 : index
      %60 = vector.load %arg12[%c0_35, %c0_36] : memref<16x1xf32, #tpu.memory_space<vmem>>, vector<16x1xf32>
      %61 = arith.subf %56, %60 : vector<16x1xf32>
      %cst_37 = arith.constant 0.000000e+00 : f32
      %62 = vector.broadcast %cst_37 : f32 to vector<16x1xf32>
      %63 = arith.select %58, %61, %62 : vector<16x1xi1>, vector<16x1xf32>
      %64 = arith.addf %59, %63 : vector<16x1xf32>
      %c0_38 = arith.constant 0 : index
      %c0_39 = arith.constant 0 : index
      %65 = vector.load %arg13[%c0_38, %c0_39] : memref<16x1xf32, #tpu.memory_space<vmem>>, vector<16x1xf32>
      tpu.vector_store %arg13[%c0_38, %c0_39], %64 {strides = array<i32>} : memref<16x1xf32, #tpu.memory_space<vmem>>, vector<16x1xf32>,
      %c0_40 = arith.constant 0 : index
      %c0_41 = arith.constant 0 : index
      %66 = vector.load %arg14[%c0_40, %c0_41] : memref<16x1xf32, #tpu.memory_space<vmem>>, vector<16x1xf32>
      %67 = arith.extui %58 : vector<16x1xi1> to vector<16x1xi32>
      %68 = arith.sitofp %67 : vector<16x1xi32> to vector<16x1xf32>
      %69 = arith.addf %66, %68 : vector<16x1xf32>
      %c0_42 = arith.constant 0 : index
      %c0_43 = arith.constant 0 : index
      %70 = vector.load %arg14[%c0_42, %c0_43] : memref<16x1xf32, #tpu.memory_space<vmem>>, vector<16x1xf32>
      tpu.vector_store %arg14[%c0_42, %c0_43], %69 {strides = array<i32>} : memref<16x1xf32, #tpu.memory_space<vmem>>, vector<16x1xf32>,
    } else {
    }
    %c0_i32_26 = arith.constant 0 : i32
    %48 = arith.cmpi eq, %arg1, %c0_i32_26 : i32
    %c0_i32_27 = arith.constant 0 : i32
    %49 = arith.cmpi eq, %arg2, %c0_i32_27 : i32
    %50 = arith.andi %48, %49 : i1
    %51 = arith.extui %50 : i1 to i32
    %c0_i32_28 = arith.constant 0 : i32
    %52 = arith.cmpi ne, %51, %c0_i32_28 : i32
    scf.if %52 {
      %c0_29 = arith.constant 0 : index
      %c0_30 = arith.constant 0 : index
      %53 = vector.load %arg3[%c0_29, %c0_30] : memref<2x8xf32, #tpu.memory_space<vmem>>, vector<2x8xf32>
      %c0_31 = arith.constant 0 : index
      %c0_32 = arith.constant 0 : index
      %54 = vector.load %arg4[%c0_31, %c0_32] : memref<2x8xf32, #tpu.memory_space<vmem>>, vector<2x8xf32>
      %c0_33 = arith.constant 0 : index
      %c0_34 = arith.constant 0 : index
      %55 = vector.load %arg5[%c0_33, %c0_34] : memref<2x8xf32, #tpu.memory_space<vmem>>, vector<2x8xf32>
      %c0_35 = arith.constant 0 : index
      %c0_36 = arith.constant 0 : index
      %56 = vector.load %arg6[%c0_35, %c0_36] : memref<2x8xf32, #tpu.memory_space<vmem>>, vector<2x8xf32>
      %57 = arith.subf %53, %54 : vector<2x8xf32>
      %58 = math.exp %57 : vector<2x8xf32>
      %59 = arith.mulf %58, %55 : vector<2x8xf32>
      %cst_37 = arith.constant 8.000000e-01 : f32
      %cst_38 = arith.constant 1.200000e+00 : f32
      %60 = vector.broadcast %cst_37 : f32 to vector<2x8xf32>
      %61 = arith.maximumf %60, %58 : vector<2x8xf32>
      %62 = vector.broadcast %cst_38 : f32 to vector<2x8xf32>
      %63 = arith.minimumf %62, %61 : vector<2x8xf32>
      %64 = arith.mulf %63, %55 : vector<2x8xf32>
      %65 = arith.minimumf %59, %64 : vector<2x8xf32>
      %cst_39 = arith.constant 0.000000e+00 : f32
      %66 = vector.broadcast %cst_39 : f32 to vector<2x8xf32>
      %67 = arith.subf %66, %65 : vector<2x8xf32>
      %68 = arith.mulf %67, %56 : vector<2x8xf32>
      %cst_40 = arith.constant dense<0.000000e+00> : vector<2xf32>
      %69 = vector.multi_reduction <add>, %68, %cst_40 [1] : vector<2x8xf32> to vector<2xf32>
      %70 = vector.shape_cast %69 : vector<2xf32> to vector<2x1xf32>
      %cst_41 = arith.constant dense<0.000000e+00> : vector<2xf32>
      %71 = vector.multi_reduction <add>, %56, %cst_41 [1] : vector<2x8xf32> to vector<2xf32>
      %72 = vector.shape_cast %71 : vector<2xf32> to vector<2x1xf32>
      %73 = arith.divf %70, %72 : vector<2x1xf32>
      %74 = vector.shape_cast %73 : vector<2x1xf32> to vector<1x2x1xf32>
      %cst_42 = arith.constant dense<0.000000e+00> : vector<1xf32>
      %75 = vector.multi_reduction <add>, %74, %cst_42 [1, 2] : vector<1x2x1xf32> to vector<1xf32>
      %76 = vector.shape_cast %75 : vector<1xf32> to vector<1x1x1xf32>
      %77 = vector.extract %76[0, 0, 0] : f32 from vector<1x1x1xf32>
      %cst_43 = arith.constant 2.000000e+00 : f32
      %78 = arith.divf %77, %cst_43 : f32
      %c0_44 = arith.constant 0 : index
      %c0_45 = arith.constant 0 : index
      %79 = vector.load %arg13[%c0_44, %c0_45] : memref<16x1xf32, #tpu.memory_space<vmem>>, vector<16x1xf32>
      %80 = vector.shape_cast %79 : vector<16x1xf32> to vector<1x16x1xf32>
      %cst_46 = arith.constant dense<0.000000e+00> : vector<1xf32>
      %81 = vector.multi_reduction <add>, %80, %cst_46 [1, 2] : vector<1x16x1xf32> to vector<1xf32>
      %82 = vector.shape_cast %81 : vector<1xf32> to vector<1x1x1xf32>
      %83 = vector.extract %82[0, 0, 0] : f32 from vector<1x1x1xf32>
      %c0_47 = arith.constant 0 : index
      %c0_48 = arith.constant 0 : index
      %84 = vector.load %arg14[%c0_47, %c0_48] : memref<16x1xf32, #tpu.memory_space<vmem>>, vector<16x1xf32>
      %85 = vector.shape_cast %84 : vector<16x1xf32> to vector<1x16x1xf32>
      %cst_49 = arith.constant dense<0.000000e+00> : vector<1xf32>
      %86 = vector.multi_reduction <add>, %85, %cst_49 [1, 2] : vector<1x16x1xf32> to vector<1xf32>
      %87 = vector.shape_cast %86 : vector<1xf32> to vector<1x1x1xf32>
      %88 = vector.extract %87[0, 0, 0] : f32 from vector<1x1x1xf32>
      %89 = tpu.iota {dimensions = array<i32: 1>} : vector<8x128xi32>
      %90 = tpu.iota {dimensions = array<i32: 0>} : vector<8x128xi32>
      %c0_i32_50 = arith.constant 0 : i32
      %91 = vector.broadcast %c0_i32_50 : i32 to vector<8x128xi32>
      %92 = arith.cmpi eq, %90, %91 : vector<8x128xi32>
      %c0_i32_51 = arith.constant 0 : i32
      %93 = vector.broadcast %c0_i32_51 : i32 to vector<8x128xi32>
      %94 = arith.cmpi eq, %89, %93 : vector<8x128xi32>
      %95 = arith.andi %92, %94 : vector<8x128xi1>
      %cst_52 = arith.constant 0.000000e+00 : f32
      %96 = vector.broadcast %83 : f32 to vector<8x128xf32>
      %97 = vector.broadcast %cst_52 : f32 to vector<8x128xf32>
      %98 = arith.select %95, %96, %97 : vector<8x128xi1>, vector<8x128xf32>
      %c0_i32_53 = arith.constant 0 : i32
      %99 = vector.broadcast %c0_i32_53 : i32 to vector<8x128xi32>
      %100 = arith.cmpi eq, %90, %99 : vector<8x128xi32>
      %c1_i32 = arith.constant 1 : i32
      %101 = vector.broadcast %c1_i32 : i32 to vector<8x128xi32>
      %102 = arith.cmpi eq, %89, %101 : vector<8x128xi32>
      %103 = arith.andi %100, %102 : vector<8x128xi1>
      %104 = vector.broadcast %88 : f32 to vector<8x128xf32>
      %105 = arith.select %103, %104, %98 : vector<8x128xi1>, vector<8x128xf32>
      %c0_i32_54 = arith.constant 0 : i32
      %106 = vector.broadcast %c0_i32_54 : i32 to vector<8x128xi32>
      %107 = arith.cmpi eq, %90, %106 : vector<8x128xi32>
      %c2_i32 = arith.constant 2 : i32
      %108 = vector.broadcast %c2_i32 : i32 to vector<8x128xi32>
      %109 = arith.cmpi eq, %89, %108 : vector<8x128xi32>
      %110 = arith.andi %107, %109 : vector<8x128xi1>
      %111 = vector.broadcast %78 : f32 to vector<8x128xf32>
      %112 = arith.select %110, %111, %105 : vector<8x128xi1>, vector<8x128xf32>
      %c0_55 = arith.constant 0 : index
      %c0_56 = arith.constant 0 : index
      %113 = vector.load %arg9[%c0_55, %c0_56] : memref<8x128xf32, #tpu.memory_space<vmem>>, vector<8x128xf32>
      tpu.vector_store %arg9[%c0_55, %c0_56], %112 {strides = array<i32>} : memref<8x128xf32, #tpu.memory_space<vmem>>, vector<8x128xf32>,
    } else {
    }
    return
  }
  func.func @transform_0(%arg0: i32, %arg1: i32, %arg2: i32) -> (i32, i32) {
    %c0_i32 = arith.constant 0 : i32
    %c0_i32_0 = arith.constant 0 : i32
    %c0_i32_1 = arith.constant 0 : i32
    return %c0_i32, %c0_i32_0 : i32, i32
  }
  func.func @transform_1(%arg0: i32, %arg1: i32, %arg2: i32) -> (i32, i32) {
    %c0_i32 = arith.constant 0 : i32
    %c0_i32_0 = arith.constant 0 : i32
    %c0_i32_1 = arith.constant 0 : i32
    return %c0_i32, %c0_i32_0 : i32, i32
  }
  func.func @transform_2(%arg0: i32, %arg1: i32, %arg2: i32) -> (i32, i32) {
    %c0_i32 = arith.constant 0 : i32
    %c0_i32_0 = arith.constant 0 : i32
    %c0_i32_1 = arith.constant 0 : i32
    return %c0_i32, %c0_i32_0 : i32, i32
  }
  func.func @transform_3(%arg0: i32, %arg1: i32, %arg2: i32) -> (i32, i32) {
    %c0_i32 = arith.constant 0 : i32
    %c0_i32_0 = arith.constant 0 : i32
    %c0_i32_1 = arith.constant 0 : i32
    return %c0_i32, %c0_i32_0 : i32, i32
  }
  func.func @transform_4(%arg0: i32, %arg1: i32, %arg2: i32) -> (i32, i32) {
    %c1_i32 = arith.constant 1 : i32
    %0 = arith.muli %arg0, %c1_i32 : i32
    %1 = arith.addi %0, %arg1 : i32
    %c0_i32 = arith.constant 0 : i32
    return %1, %arg2 : i32, i32
  }
  func.func @transform_5(%arg0: i32, %arg1: i32, %arg2: i32) -> (i32, i32) {
    %c1_i32 = arith.constant 1 : i32
    %0 = arith.muli %arg0, %c1_i32 : i32
    %1 = arith.addi %0, %arg1 : i32
    %c0_i32 = arith.constant 0 : i32
    %c0_i32_0 = arith.constant 0 : i32
    return %1, %c0_i32 : i32, i32
  }
  func.func @transform_6(%arg0: i32, %arg1: i32, %arg2: i32) -> (i32, i32) {
    %c0_i32 = arith.constant 0 : i32
    %c0_i32_0 = arith.constant 0 : i32
    return %arg0, %c0_i32 : i32, i32
  }
}

</mosaic_0001>

<llo_original>
// kernel: tpu_custom_call.1
$region0: #{tpu_custom_call.1}
  #allocation0 [shape = 'u32[]', space=smem, size = 0x4, offset = 0x4, fixed_abs, tag = 'smem constant byte address 0x4 - core index']
  #allocation1 [shape = 'u32[144,128]{1,0:T(1,128)}', space=vmem, size = 0x12000, scoped, tag = 'internal scratch']
  #allocation2 [shape = 'f32[16,1]{1,0:T(8,128)}', space=vmem, size = 0x2000, scoped, tag = 'scratch operand']
  #allocation3 [shape = 'f32[16,1]{1,0:T(8,128)}', space=vmem, size = 0x2000, scoped, tag = 'scratch operand']
  #allocation4 [shape = 'f32[16,1]{1,0:T(8,128)}', space=vmem, size = 0x2000, scoped, tag = 'scratch operand']
  #allocation5 [shape = 'f32[16,1]{1,0:T(8,128)}', space=vmem, size = 0x2000, scoped, tag = 'scratch operand']
  #allocation6 [shape = 'f32[16,1]{1,0:T(8,128)}', space=vmem, size = 0x2000, scoped, tag = 'scratch operand']
  %s0 = inlined_call_operand.vmem [shape: f32[2,8], index: 0, kind: input, shape index: {}]
  %s1 = inlined_call_operand.vmem [shape: f32[2,8], index: 1, kind: input, shape index: {}]
  %s2 = inlined_call_operand.vmem [shape: f32[2,8], index: 2, kind: input, shape index: {}]
  %s3 = inlined_call_operand.vmem [shape: f32[2,8], index: 3, kind: input, shape index: {}]
  %s4 = inlined_call_operand.vmem [shape: bf16[16,128], index: 4, kind: input, shape index: {}]
  %s5 = inlined_call_operand.vmem [shape: s32[16,1], index: 5, kind: input, shape index: {}]
  %s6 = inlined_call_operand.hbm [shape: f32[8,128], index: 6, kind: output, shape index: {}]
  %s7 = sld [smem:[#allocation0]]
  $region50: #{tpu_custom_call.1} parent=0
    _
  %s9 = ssub.s32 1, %s7
  %s10 = scalar_select 0, %s9, %s7
  $region1: #{tpu_custom_call.1} parent=0
    #allocation7 [shape = 'u8[4096]{0}', space=vmem, size = 0x1000, scoped, tag = 'output window, operand 0, single buffered']
    #allocation8 [shape = 's32[1]{0}', space=sflag, size = 0x4, scoped, tag = 'scoped memory for tpu_custom_call.1']
    %11 = vsyncpa [#allocation8], 0
    // Predicated region
    $region2: #{tpu_custom_call.1} parent=1 // pred_check
      _
    $region3: #{tpu_custom_call.1} parent=1 // pred_check_branch
      %13 = sbr.rel (0) target = $region5
    $region4: #{tpu_custom_call.1} parent=1 // pred_region
      _
    $region5: #{tpu_custom_call.1} parent=1 // pred_fallthru
      _
    // Predicated region
    $region6: #{tpu_custom_call.1} parent=1 // pred_check
      _
    $region7: #{tpu_custom_call.1} parent=1 // pred_check_branch
      %15 = sbr.rel (0) target = $region9
    $region8: #{tpu_custom_call.1} parent=1 // pred_region
      _
    $region9: #{tpu_custom_call.1} parent=1 // pred_fallthru
      _
    // Predicated region
    $region10: #{tpu_custom_call.1} parent=1 // pred_check
      _
    $region11: #{tpu_custom_call.1} parent=1 // pred_check_branch
      %17 = sbr.rel (0) target = $region13
    $region12: #{tpu_custom_call.1} parent=1 // pred_region
      _
    $region13: #{tpu_custom_call.1} parent=1 // pred_fallthru
      _
    // Predicated region
    $region14: #{tpu_custom_call.1} parent=1 // pred_check
      _
    $region15: #{tpu_custom_call.1} parent=1 // pred_check_branch
      %19 = sbr.rel (0) target = $region17
    $region16: #{tpu_custom_call.1} parent=1 // pred_region
      _
    $region17: #{tpu_custom_call.1} parent=1 // pred_fallthru
      _
    // Predicated region
    $region18: #{tpu_custom_call.1} parent=1 // pred_check
      _
    $region19: #{tpu_custom_call.1} parent=1 // pred_check_branch
      %21 = sbr.rel (0) target = $region21
    $region20: #{tpu_custom_call.1} parent=1 // pred_region
      %s22 = sadd.s32 0, 0
      %s23 = smul.u32 2, %s22
      %p24 = scmp.lt.s32.totalorder %s23, 1
      %s25 = scalar_select %p24, %s23, 1
      %s26 = smul.addr %s25, 4
      %s27 = scalar_lea.vmem %s4, %s26
      %s28 = sadd.s32 0, 0
      %s29 = smul.u32 2, %s28
    $region21: #{tpu_custom_call.1} parent=1 // pred_fallthru
      _
    // Predicated region
    $region22: #{tpu_custom_call.1} parent=1 // pred_check
      _
    $region23: #{tpu_custom_call.1} parent=1 // pred_check_branch
      %31 = sbr.rel (0) target = $region25
    $region24: #{tpu_custom_call.1} parent=1 // pred_region
      %s32 = sadd.s32 0, 0
      %s33 = smul.u32 2, %s32
      %p34 = scmp.lt.s32.totalorder %s33, 1
      %s35 = scalar_select %p34, %s33, 1
      %s36 = smul.addr %s35, 8
      %s37 = scalar_lea.vmem %s5, %s36
      %s38 = sadd.s32 0, 0
      %s39 = smul.u32 2, %s38
    $region25: #{tpu_custom_call.1} parent=1 // pred_fallthru
      _
    %s40 = sadd.s32 0, 0
    %s41 = smul.u32 2, %s40
    %p42 = scmp.lt.s32.totalorder %s41, 1
    %s43 = scalar_select %p42, %s41, 1
    %s44 = smul.addr %s43, 4
    %s45 = scalar_lea.vmem %s4, %s44
    %s46 = sadd.s32 0, 0
    %s47 = smul.u32 2, %s46
    %p48 = scmp.lt.s32.totalorder %s47, 1
    %s49 = scalar_select %p48, %s47, 1
    %s50 = smul.addr %s49, 8
    %s51 = scalar_lea.vmem %s5, %s50
    %s52 = sadd.s32 0, 0
    %s53 = smul.u32 2, %s52
    %p54 = scmp.lt.s32.totalorder %s53, 1
    %s55 = scalar_select %p54, %s53, 1
    %s56 = smul.addr %s55, 4
    %s57 = scalar_lea.vmem %s4, %s56
    %s58 = sadd.s32 0, 0
    %s59 = smul.u32 2, %s58
    %s60 = sadd.s32 0, 0
    %s61 = smul.u32 2, %s60
    %p62 = scmp.lt.s32.totalorder %s61, 1
    %s63 = scalar_select %p62, %s61, 1
    %s64 = smul.addr %s63, 8
    %s65 = scalar_lea.vmem %s5, %s64
    %s66 = sadd.s32 0, 0
    %s67 = smul.u32 2, %s66
    %p68 = scmp.eq.s32.totalorder 0, 0
    %p69 = scmp.eq.s32.totalorder 0, 0
    %p70 = pnand %p68, %p69
    %p71 = pneg %p70
    // Predicated region
    $region26: #{tpu_custom_call.1} parent=1 // pred_check
      _
    $region27: #{tpu_custom_call.1} parent=1 // pred_check_branch
      %73 = sbr.rel (%p70) target = $region29
    $region28: #{tpu_custom_call.1} parent=1 // pred_region
      %vm74 = vcmask 7168
      %75 = vst.msk [vmem:[#allocation5] sm:$0xff] %vm74, 0.0
      %76 = vst.msk [vmem:[#allocation5 + $0x8] sm:$0xff] %vm74, 0.0
      %77 = vst.msk [vmem:[#allocation6] sm:$0xff] %vm74, 0.0
      %78 = vst.msk [vmem:[#allocation6 + $0x8] sm:$0xff] %vm74, 0.0
    $region29: #{tpu_custom_call.1} parent=1 // pred_fallthru
      _
    // Predicated region
    $region30: #{tpu_custom_call.1} parent=1 // pred_check
      %p79 = pneg %p69
    $region31: #{tpu_custom_call.1} parent=1 // pred_check_branch
      %81 = sbr.rel (%p79) target = $region33
    $region32: #{tpu_custom_call.1} parent=1 // pred_region
      %vm82 = vcmask 7168
      %83 = vst.msk [vmem:[#allocation2] sm:$0xff] %vm82, -inf
      %84 = vst.msk [vmem:[#allocation2 + $0x8] sm:$0xff] %vm82, -inf
      %85 = vst.msk [vmem:[#allocation3] sm:$0xff] %vm82, 0.0
      %86 = vst.msk [vmem:[#allocation3 + $0x8] sm:$0xff] %vm82, 0.0
      %87 = vst.msk [vmem:[#allocation4] sm:$0xff] %vm82, 0.0
      %88 = vst.msk [vmem:[#allocation4 + $0x8] sm:$0xff] %vm82, 0.0
    $region33: #{tpu_custom_call.1} parent=1 // pred_fallthru
      _
    %v89 = vld [vmem:[%s57] sm:$0xf]
    %v90 = vld [vmem:[%s57 + $0x4] sm:$0xf]
    %v91 = vunpack.c.l.bf16 %v89
    %v92 = vunpack.c.l.bf16 %v90
    %v93 = vld [vmem:[%s65] sm:$0xff]
    %v94 = vld [vmem:[%s65 + $0x8] sm:$0xff]
    %v95 = vlaneseq
    %v96 = vand.u32 %v95, 127
    %s97 = smul.u32 0, 128
    %v98 = vstv %s97
    %v99 = vadd.s32 %v96, %v98
    %100 = vmax.xlane.f32.xlu0 %v91
    %v101 = vpop.xlane.xlu0 %100
    %102 = vmax.xlane.f32.xlu0 %v92
    %v103 = vpop.xlane.xlu0 %102
    %v104 = vsub.f32 %v91, %v101
    %v105 = vsub.f32 %v92, %v103
    %v106 = vmul.f32 %v104, 1.442695
    %v107 = vpow.pop %v106
    %v108 = vmul.f32 %v105, 1.442695
    %v109 = vpow.pop %v108
    %110 = vadd.xlane.f32.xlu0 %v107
    %v111 = vpop.xlane.xlu0 %110
    %112 = vadd.xlane.f32.xlu0 %v109
    %v113 = vpop.xlane.xlu0 %112
    %114 = vset.pattern.permute.xlu0 0
    %115 = vperm.xlu0 %114, %v93
    %v116 = vpop.permute.xlu0 %115
    %117 = vset.pattern.permute.xlu0 0
    %118 = vperm.xlu0 %117, %v94
    %v119 = vpop.permute.xlu0 %118
    %vm120 = vcmp.eq.s32.totalorder %v99, %v116
    %vm121 = vcmp.eq.s32.totalorder %v99, %v119
    %v122 = vsel %vm120, %v91, 0.0
    %v123 = vsel %vm121, %v92, 0.0
    %124 = vadd.xlane.f32.xlu0 %v122
    %v125 = vpop.xlane.xlu0 %124
    %126 = vadd.xlane.f32.xlu0 %v123
    %v127 = vpop.xlane.xlu0 %126
    %v128 = vld [vmem:[#allocation2] sm:$0xff]
    %v129 = vld [vmem:[#allocation2 + $0x8] sm:$0xff]
    %v130 = vmax.f32 %v128, %v101
    %v131 = vmax.f32 %v129, %v103
    %v132 = vld [vmem:[#allocation3] sm:$0xff]
    %v133 = vld [vmem:[#allocation3 + $0x8] sm:$0xff]
    %v134 = vsub.f32 %v128, %v130
    %v135 = vsub.f32 %v129, %v131
    %v136 = vmul.f32 %v134, 1.442695
    %v137 = vpow.pop %v136
    %v138 = vmul.f32 %v135, 1.442695
    %v139 = vpow.pop %v138
    %v140 = vmul.f32 %v132, %v137
    %v141 = vmul.f32 %v133, %v139
    %v142 = vsub.f32 %v101, %v130
    %v143 = vsub.f32 %v103, %v131
    %v144 = vmul.f32 %v142, 1.442695
    %v145 = vpow.pop %v144
    %v146 = vmul.f32 %v143, 1.442695
    %v147 = vpow.pop %v146
    %v148 = vmul.f32 %v111, %v145
    %v149 = vmul.f32 %v113, %v147
    %v150 = vadd.f32 %v140, %v148
    %v151 = vadd.f32 %v141, %v149
    %vm152 = vcmask 7168
    %153 = vst.msk [vmem:[#allocation3] sm:$0xff] %vm152, %v150
    %154 = vst.msk [vmem:[#allocation3 + $0x8] sm:$0xff] %vm152, %v151
    %v155 = vld [vmem:[#allocation4] sm:$0xff]
    %v156 = vld [vmem:[#allocation4 + $0x8] sm:$0xff]
    %v157 = vadd.f32 %v155, %v125
    %v158 = vadd.f32 %v156, %v127
    %159 = vst.msk [vmem:[#allocation4] sm:$0xff] %vm152, %v157
    %160 = vst.msk [vmem:[#allocation4 + $0x8] sm:$0xff] %vm152, %v158
    %161 = vst.msk [vmem:[#allocation2] sm:$0xff] %vm152, %v130
    %162 = vst.msk [vmem:[#allocation2 + $0x8] sm:$0xff] %vm152, %v131
    // Predicated region
    $region34: #{tpu_custom_call.1} parent=1 // pred_check
      %p163 = pneg %p69
    $region35: #{tpu_custom_call.1} parent=1 // pred_check_branch
      %165 = sbr.rel (%p163) target = $region37
    $region36: #{tpu_custom_call.1} parent=1 // pred_region
      %v166 = vld [vmem:[#allocation3] sm:$0xff]
      %v167 = vld [vmem:[#allocation3 + $0x8] sm:$0xff]
      %v168 = vlog2.pop %v166
      %v169 = vmul.f32 %v168, 0.6931472
      %v170 = vlog2.pop %v167
      %v171 = vmul.f32 %v170, 0.6931472
      %v172 = vld [vmem:[#allocation2] sm:$0xff]
      %v173 = vld [vmem:[#allocation2 + $0x8] sm:$0xff]
      %v174 = vadd.f32 %v169, %v172
      %v175 = vadd.f32 %v171, %v173
      %vm176 = vcmp.ne.s32.totalorder %v93, 4294967196
      %vm177 = vcmp.ne.s32.totalorder %v94, 4294967196
      %v178 = vld [vmem:[#allocation5] sm:$0xff]
      %v179 = vld [vmem:[#allocation5 + $0x8] sm:$0xff]
      %v180 = vld [vmem:[#allocation4] sm:$0xff]
      %v181 = vld [vmem:[#allocation4 + $0x8] sm:$0xff]
      %v182 = vsub.f32 %v174, %v180
      %v183 = vsub.f32 %v175, %v181
      %v184 = vsel %vm176, %v182, 0.0
      %v185 = vsel %vm177, %v183, 0.0
      %v186 = vadd.f32 %v178, %v184
      %v187 = vadd.f32 %v179, %v185
      %188 = vst.msk [vmem:[#allocation5] sm:$0xff] %vm152, %v186
      %189 = vst.msk [vmem:[#allocation5 + $0x8] sm:$0xff] %vm152, %v187
      %v190 = vld [vmem:[#allocation6] sm:$0xff]
      %v191 = vld [vmem:[#allocation6 + $0x8] sm:$0xff]
      %v192 = vsel %vm176, 1, 0
      %v193 = vsel %vm177, 1, 0
      %v194 = vcvt.s32.f32 %v192
      %v195 = vcvt.s32.f32 %v193
      %v196 = vadd.f32 %v190, %v194
      %v197 = vadd.f32 %v191, %v195
      %198 = vst.msk [vmem:[#allocation6] sm:$0xff] %vm152, %v196
      %199 = vst.msk [vmem:[#allocation6 + $0x8] sm:$0xff] %vm152, %v197
    $region37: #{tpu_custom_call.1} parent=1 // pred_fallthru
      _
    // Predicated region
    $region38: #{tpu_custom_call.1} parent=1 // pred_check
      _
    $region39: #{tpu_custom_call.1} parent=1 // pred_check_branch
      %201 = sbr.rel (%p70) target = $region41
    $region40: #{tpu_custom_call.1} parent=1 // pred_region
      %v202 = vld [vmem:[%s0] sm:$0x3]
      %v203 = vld [vmem:[%s1] sm:$0x3]
      %v204 = vld [vmem:[%s2] sm:$0x3]
      %v205 = vld [vmem:[%s3] sm:$0x3]
      %v206 = vsub.f32 %v202, %v203
      %v207 = vmul.f32 %v206, 1.442695
      %v208 = vpow.pop %v207
      %v209 = vmul.f32 %v208, %v204
      %v210 = vmax.f32 %v208, 0.8
      %v211 = vmin.f32 %v210, 1.2
      %v212 = vmul.f32 %v211, %v204
      %v213 = vmin.f32 %v209, %v212
      %v214 = vsub.f32 0.0, %v213
      %v215 = vmul.f32 %v214, %v205
      %vm216 = vcmask 58368
      %v217 = vsel %vm216, %v215, 0.0
      %218 = vadd.xlane.f32.xlu0 %v217
      %v219 = vpop.xlane.xlu0 %218
      %v220 = vsel %vm216, %v205, 0.0
      %221 = vadd.xlane.f32.xlu0 %v220
      %v222 = vpop.xlane.xlu0 %221
      %v223 = vrcp.pop %v222
      %v224 = vmul.f32 %v219, %v223
      %vm225 = vcmask 1024
      %v226 = vsel %vm225, %v224, 0.0
      %227 = vadd.xlane.f32.xlu0 %v226
      %v228 = vpop.xlane.xlu0 %227
      %v229 = vrot.slane %v228, 4
      %v230 = vadd.f32 %v228, %v229
      %v231 = vrot.slane %v230, 2
      %v232 = vadd.f32 %v230, %v231
      %v233 = vrot.slane %v232, 1
      %v234 = vadd.f32 %v232, %v233
      %s235 = vtos %v234
      %v236 = vrcp.pop 2.0
      %s237 = vtos %v236
      %s238 = smul.f32 %s235, %s237
      %v239 = vld [vmem:[#allocation5] sm:$0xff]
      %v240 = vld [vmem:[#allocation5 + $0x8] sm:$0xff]
      %v241 = vsel %vm152, %v239, 0.0
      %v242 = vsel %vm152, %v240, 0.0
      %v243 = vadd.f32 %v241, %v242
      %244 = vadd.xlane.f32.xlu0 %v243
      %v245 = vpop.xlane.xlu0 %244
      %v246 = vrot.slane %v245, 4
      %v247 = vadd.f32 %v245, %v246
      %v248 = vrot.slane %v247, 2
      %v249 = vadd.f32 %v247, %v248
      %v250 = vrot.slane %v249, 1
      %v251 = vadd.f32 %v249, %v250
      %s252 = vtos %v251
      %v253 = vld [vmem:[#allocation6] sm:$0xff]
      %v254 = vld [vmem:[#allocation6 + $0x8] sm:$0xff]
      %v255 = vsel %vm152, %v253, 0.0
      %v256 = vsel %vm152, %v254, 0.0
      %v257 = vadd.f32 %v255, %v256
      %258 = vadd.xlane.f32.xlu0 %v257
      %v259 = vpop.xlane.xlu0 %258
      %v260 = vrot.slane %v259, 4
      %v261 = vadd.f32 %v259, %v260
      %v262 = vrot.slane %v261, 2
      %v263 = vadd.f32 %v261, %v262
      %v264 = vrot.slane %v263, 1
      %v265 = vadd.f32 %v263, %v264
      %s266 = vtos %v265
      %v267 = vlaneseq
      %v268 = vshrl.u32 %v267, 7
      %vm269 = vcmp.eq.s32.totalorder %v268, 0
      %vm270 = vcmp.eq.s32.totalorder %v96, 0
      %vm271 = vmand %vm269, %vm270
      %v272 = vstv %s252
      %v273 = vsel %vm271, %v272, 0.0
      %vm274 = vcmp.eq.s32.totalorder %v96, 1
      %vm275 = vmand %vm269, %vm274
      %v276 = vstv %s266
      %v277 = vsel %vm275, %v276, %v273
      %vm278 = vcmp.eq.s32.totalorder %v96, 2
      %vm279 = vmand %vm269, %vm278
      %v280 = vstv %s238
      %v281 = vsel %vm279, %v280, %v277
      %282 = vst [vmem:[#allocation7] sm:$0xff] %v281
    $region41: #{tpu_custom_call.1} parent=1 // pred_fallthru
      _
    // Predicated region
    $region42: #{tpu_custom_call.1} parent=1 // pred_check
      _
    $region43: #{tpu_custom_call.1} parent=1 // pred_check_branch
      %284 = sbr.rel (0) target = $region45
    $region44: #{tpu_custom_call.1} parent=1 // pred_region
      %s286 = ssub.s32 128, 128
      %287 = vsyncadd [#allocation8], %s286
      %s289 = sshll.u32 [#allocation7], 4
      %s290 = int_to_ptr.vmem [resolvable:$true] %s289
      %292 = dma.vmem_to_hbm [thread:$0]  %s290, 128, %s6, [#allocation8]
    $region45: #{tpu_custom_call.1} parent=1 // pred_fallthru
      _
    // Predicated region
    $region46: #{tpu_custom_call.1} parent=1 // pred_check
      _
    $region47: #{tpu_custom_call.1} parent=1 // pred_check_branch
      %294 = sbr.rel (0) target = $region49
    $region48: #{tpu_custom_call.1} parent=1 // pred_region
      %295 = dma.done [#allocation8], 128
    $region49: #{tpu_custom_call.1} parent=1 // pred_fallthru
      _
    %296 = vsyncpa [#allocation8], 1

// kernel: tpu_custom_call.1
$region0: #{tpu_custom_call.1}
  #allocation0 [shape = 'u32[]', space=smem, size = 0x4, offset = 0x4, fixed_abs, tag = 'smem constant byte address 0x4 - core index']
  #allocation1 [shape = 'u32[144,128]{1,0:T(1,128)}', space=vmem, size = 0x12000, scoped, tag = 'internal scratch']
  #allocation2 [shape = 'f32[16,1]{1,0:T(8,128)}', space=vmem, size = 0x2000, scoped, tag = 'scratch operand']
  #allocation3 [shape = 'f32[16,1]{1,0:T(8,128)}', space=vmem, size = 0x2000, scoped, tag = 'scratch operand']
  #allocation4 [shape = 'f32[16,1]{1,0:T(8,128)}', space=vmem, size = 0x2000, scoped, tag = 'scratch operand']
  #allocation5 [shape = 'f32[16,1]{1,0:T(8,128)}', space=vmem, size = 0x2000, scoped, tag = 'scratch operand']
  #allocation6 [shape = 'f32[16,1]{1,0:T(8,128)}', space=vmem, size = 0x2000, scoped, tag = 'scratch operand']
  %s0 = inlined_call_operand.vmem [shape: f32[2,8], index: 0, kind: input, shape index: {}]
  %s1 = inlined_call_operand.vmem [shape: f32[2,8], index: 1, kind: input, shape index: {}]
  %s2 = inlined_call_operand.vmem [shape: f32[2,8], index: 2, kind: input, shape index: {}]
  %s3 = inlined_call_operand.vmem [shape: f32[2,8], index: 3, kind: input, shape index: {}]
  %s4 = inlined_call_operand.vmem [shape: bf16[16,128], index: 4, kind: input, shape index: {}]
  %s5 = inlined_call_operand.vmem [shape: s32[16,1], index: 5, kind: input, shape index: {}]
  %s6 = inlined_call_operand.hbm [shape: f32[8,128], index: 6, kind: output, shape index: {}]
  %s7 = sld [smem:[#allocation0]]
  $region50: #{tpu_custom_call.1} parent=0
    _
  %s9 = ssub.s32 1, %s7
  %s10 = scalar_select 0, %s9, %s7
  $region1: #{tpu_custom_call.1} parent=0
    #allocation7 [shape = 'u8[4096]{0}', space=vmem, size = 0x1000, scoped, tag = 'output window, operand 0, single buffered']
    #allocation8 [shape = 's32[1]{0}', space=sflag, size = 0x4, scoped, tag = 'scoped memory for tpu_custom_call.1']
    %11 = vsyncpa [#allocation8], 0
    // Predicated region
    $region2: #{tpu_custom_call.1} parent=1 // pred_check
      _
    $region3: #{tpu_custom_call.1} parent=1 // pred_check_branch
      %13 = sbr.rel (0) target = $region5
    $region4: #{tpu_custom_call.1} parent=1 // pred_region
      _
    $region5: #{tpu_custom_call.1} parent=1 // pred_fallthru
      _
    // Predicated region
    $region6: #{tpu_custom_call.1} parent=1 // pred_check
      _
    $region7: #{tpu_custom_call.1} parent=1 // pred_check_branch
      %15 = sbr.rel (0) target = $region9
    $region8: #{tpu_custom_call.1} parent=1 // pred_region
      _
    $region9: #{tpu_custom_call.1} parent=1 // pred_fallthru
      _
    // Predicated region
    $region10: #{tpu_custom_call.1} parent=1 // pred_check
      _
    $region11: #{tpu_custom_call.1} parent=1 // pred_check_branch
      %17 = sbr.rel (0) target = $region13
    $region12: #{tpu_custom_call.1} parent=1 // pred_region
      _
    $region13: #{tpu_custom_call.1} parent=1 // pred_fallthru
      _
    // Predicated region
    $region14: #{tpu_custom_call.1} parent=1 // pred_check
      _
    $region15: #{tpu_custom_call.1} parent=1 // pred_check_branch
      %19 = sbr.rel (0) target = $region17
    $region16: #{tpu_custom_call.1} parent=1 // pred_region
      _
    $region17: #{tpu_custom_call.1} parent=1 // pred_fallthru
      _
    // Predicated region
    $region18: #{tpu_custom_call.1} parent=1 // pred_check
      _
    $region19: #{tpu_custom_call.1} parent=1 // pred_check_branch
      %21 = sbr.rel (0) target = $region21
    $region20: #{tpu_custom_call.1} parent=1 // pred_region
      %s22 = sadd.s32 0, 0
      %s23 = smul.u32 2, %s22
      %p24 = scmp.lt.s32.totalorder %s23, 1
      %s25 = scalar_select %p24, %s23, 1
      %s26 = smul.addr %s25, 4
      %s27 = scalar_lea.vmem %s4, %s26
      %s28 = sadd.s32 0, 0
      %s29 = smul.u32 2, %s28
    $region21: #{tpu_custom_call.1} parent=1 // pred_fallthru
      _
    // Predicated region
    $region22: #{tpu_custom_call.1} parent=1 // pred_check
      _
    $region23: #{tpu_custom_call.1} parent=1 // pred_check_branch
      %31 = sbr.rel (0) target = $region25
    $region24: #{tpu_custom_call.1} parent=1 // pred_region
      %s32 = sadd.s32 0, 0
      %s33 = smul.u32 2, %s32
      %p34 = scmp.lt.s32.totalorder %s33, 1
      %s35 = scalar_select %p34, %s33, 1
      %s36 = smul.addr %s35, 8
      %s37 = scalar_lea.vmem %s5, %s36
      %s38 = sadd.s32 0, 0
      %s39 = smul.u32 2, %s38
    $region25: #{tpu_custom_call.1} parent=1 // pred_fallthru
      _
    %s40 = sadd.s32 0, 0
    %s41 = smul.u32 2, %s40
    %p42 = scmp.lt.s32.totalorder %s41, 1
    %s43 = scalar_select %p42, %s41, 1
    %s44 = smul.addr %s43, 4
    %s45 = scalar_lea.vmem %s4, %s44
    %s46 = sadd.s32 0, 0
    %s47 = smul.u32 2, %s46
    %p48 = scmp.lt.s32.totalorder %s47, 1
    %s49 = scalar_select %p48, %s47, 1
    %s50 = smul.addr %s49, 8
    %s51 = scalar_lea.vmem %s5, %s50
    %s52 = sadd.s32 0, 0
    %s53 = smul.u32 2, %s52
    %p54 = scmp.lt.s32.totalorder %s53, 1
    %s55 = scalar_select %p54, %s53, 1
    %s56 = smul.addr %s55, 4
    %s57 = scalar_lea.vmem %s4, %s56
    %s58 = sadd.s32 0, 0
    %s59 = smul.u32 2, %s58
    %s60 = sadd.s32 0, 0
    %s61 = smul.u32 2, %s60
    %p62 = scmp.lt.s32.totalorder %s61, 1
    %s63 = scalar_select %p62, %s61, 1
    %s64 = smul.addr %s63, 8
    %s65 = scalar_lea.vmem %s5, %s64
    %s66 = sadd.s32 0, 0
    %s67 = smul.u32 2, %s66
    %p68 = scmp.eq.s32.totalorder 0, 0
    %p69 = scmp.eq.s32.totalorder 0, 0
    %p70 = pnand %p68, %p69
    %p71 = pneg %p70
    // Predicated region
    $region26: #{tpu_custom_call.1} parent=1 // pred_check
      _
    $region27: #{tpu_custom_call.1} parent=1 // pred_check_branch
      %73 = sbr.rel (%p70) target = $region29
    $region28: #{tpu_custom_call.1} parent=1 // pred_region
      %vm74 = vcmask 7168
      %75 = vst.msk [vmem:[#allocation5] sm:$0xff] %vm74, 0.0
      %76 = vst.msk [vmem:[#allocation5 + $0x8] sm:$0xff] %vm74, 0.0
      %77 = vst.msk [vmem:[#allocation6] sm:$0xff] %vm74, 0.0
      %78 = vst.msk [vmem:[#allocation6 + $0x8] sm:$0xff] %vm74, 0.0
    $region29: #{tpu_custom_call.1} parent=1 // pred_fallthru
      _
    // Predicated region
    $region30: #{tpu_custom_call.1} parent=1 // pred_check
      %p79 = pneg %p69
    $region31: #{tpu_custom_call.1} parent=1 // pred_check_branch
      %81 = sbr.rel (%p79) target = $region33
    $region32: #{tpu_custom_call.1} parent=1 // pred_region
      %vm82 = vcmask 7168
      %83 = vst.msk [vmem:[#allocation2] sm:$0xff] %vm82, -inf
      %84 = vst.msk [vmem:[#allocation2 + $0x8] sm:$0xff] %vm82, -inf
      %85 = vst.msk [vmem:[#allocation3] sm:$0xff] %vm82, 0.0
      %86 = vst.msk [vmem:[#allocation3 + $0x8] sm:$0xff] %vm82, 0.0
      %87 = vst.msk [vmem:[#allocation4] sm:$0xff] %vm82, 0.0
      %88 = vst.msk [vmem:[#allocation4 + $0x8] sm:$0xff] %vm82, 0.0
    $region33: #{tpu_custom_call.1} parent=1 // pred_fallthru
      _
    %v89 = vld [vmem:[%s57] sm:$0xf]
    %v90 = vld [vmem:[%s57 + $0x4] sm:$0xf]
    %v91 = vunpack.c.l.bf16 %v89
    %v92 = vunpack.c.l.bf16 %v90
    %v93 = vld [vmem:[%s65] sm:$0xff]
    %v94 = vld [vmem:[%s65 + $0x8] sm:$0xff]
    %v95 = vlaneseq
    %v96 = vand.u32 %v95, 127
    %s97 = smul.u32 0, 128
    %v98 = vstv %s97
    %v99 = vadd.s32 %v96, %v98
    %100 = vmax.xlane.f32.xlu0 %v91
    %v101 = vpop.xlane.xlu0 %100
    %102 = vmax.xlane.f32.xlu0 %v92
    %v103 = vpop.xlane.xlu0 %102
    %v104 = vsub.f32 %v91, %v101
    %v105 = vsub.f32 %v92, %v103
    %v106 = vmul.f32 %v104, 1.442695
    %v107 = vpow.pop %v106
    %v108 = vmul.f32 %v105, 1.442695
    %v109 = vpow.pop %v108
    %110 = vadd.xlane.f32.xlu0 %v107
    %v111 = vpop.xlane.xlu0 %110
    %112 = vadd.xlane.f32.xlu0 %v109
    %v113 = vpop.xlane.xlu0 %112
    %114 = vset.pattern.permute.xlu0 0
    %115 = vperm.xlu0 %114, %v93
    %v116 = vpop.permute.xlu0 %115
    %117 = vset.pattern.permute.xlu0 0
    %118 = vperm.xlu0 %117, %v94
    %v119 = vpop.permute.xlu0 %118
    %vm120 = vcmp.eq.s32.totalorder %v99, %v116
    %vm121 = vcmp.eq.s32.totalorder %v99, %v119
    %v122 = vsel %vm120, %v91, 0.0
    %v123 = vsel %vm121, %v92, 0.0
    %124 = vadd.xlane.f32.xlu0 %v122
    %v125 = vpop.xlane.xlu0 %124
    %126 = vadd.xlane.f32.xlu0 %v123
    %v127 = vpop.xlane.xlu0 %126
    %v128 = vld [vmem:[#allocation2] sm:$0xff]
    %v129 = vld [vmem:[#allocation2 + $0x8] sm:$0xff]
    %v130 = vmax.f32 %v128, %v101
    %v131 = vmax.f32 %v129, %v103
    %v132 = vld [vmem:[#allocation3] sm:$0xff]
    %v133 = vld [vmem:[#allocation3 + $0x8] sm:$0xff]
    %v134 = vsub.f32 %v128, %v130
    %v135 = vsub.f32 %v129, %v131
    %v136 = vmul.f32 %v134, 1.442695
    %v137 = vpow.pop %v136
    %v138 = vmul.f32 %v135, 1.442695
    %v139 = vpow.pop %v138
    %v140 = vmul.f32 %v132, %v137
    %v141 = vmul.f32 %v133, %v139
    %v142 = vsub.f32 %v101, %v130
    %v143 = vsub.f32 %v103, %v131
    %v144 = vmul.f32 %v142, 1.442695
    %v145 = vpow.pop %v144
    %v146 = vmul.f32 %v143, 1.442695
    %v147 = vpow.pop %v146
    %v148 = vmul.f32 %v111, %v145
    %v149 = vmul.f32 %v113, %v147
    %v150 = vadd.f32 %v140, %v148
    %v151 = vadd.f32 %v141, %v149
    %vm152 = vcmask 7168
    %153 = vst.msk [vmem:[#allocation3] sm:$0xff] %vm152, %v150
    %154 = vst.msk [vmem:[#allocation3 + $0x8] sm:$0xff] %vm152, %v151
    %v155 = vld [vmem:[#allocation4] sm:$0xff]
    %v156 = vld [vmem:[#allocation4 + $0x8] sm:$0xff]
    %v157 = vadd.f32 %v155, %v125
    %v158 = vadd.f32 %v156, %v127
    %159 = vst.msk [vmem:[#allocation4] sm:$0xff] %vm152, %v157
    %160 = vst.msk [vmem:[#allocation4 + $0x8] sm:$0xff] %vm152, %v158
    %161 = vst.msk [vmem:[#allocation2] sm:$0xff] %vm152, %v130
    %162 = vst.msk [vmem:[#allocation2 + $0x8] sm:$0xff] %vm152, %v131
    // Predicated region
    $region34: #{tpu_custom_call.1} parent=1 // pred_check
      %p163 = pneg %p69
    $region35: #{tpu_custom_call.1} parent=1 // pred_check_branch
      %165 = sbr.rel (%p163) target = $region37
    $region36: #{tpu_custom_call.1} parent=1 // pred_region
      %v166 = vld [vmem:[#allocation3] sm:$0xff]
      %v167 = vld [vmem:[#allocation3 + $0x8] sm:$0xff]
      %v168 = vlog2.pop %v166
      %v169 = vmul.f32 %v168, 0.6931472
      %v170 = vlog2.pop %v167
      %v171 = vmul.f32 %v170, 0.6931472
      %v172 = vld [vmem:[#allocation2] sm:$0xff]
      %v173 = vld [vmem:[#allocation2 + $0x8] sm:$0xff]
      %v174 = vadd.f32 %v169, %v172
      %v175 = vadd.f32 %v171, %v173
      %vm176 = vcmp.ne.s32.totalorder %v93, 4294967196
      %vm177 = vcmp.ne.s32.totalorder %v94, 4294967196
      %v178 = vld [vmem:[#allocation5] sm:$0xff]
      %v179 = vld [vmem:[#allocation5 + $0x8] sm:$0xff]
      %v180 = vld [vmem:[#allocation4] sm:$0xff]
      %v181 = vld [vmem:[#allocation4 + $0x8] sm:$0xff]
      %v182 = vsub.f32 %v174, %v180
      %v183 = vsub.f32 %v175, %v181
      %v184 = vsel %vm176, %v182, 0.0
      %v185 = vsel %vm177, %v183, 0.0
      %v186 = vadd.f32 %v178, %v184
      %v187 = vadd.f32 %v179, %v185
      %188 = vst.msk [vmem:[#allocation5] sm:$0xff] %vm152, %v186
      %189 = vst.msk [vmem:[#allocation5 + $0x8] sm:$0xff] %vm152, %v187
      %v190 = vld [vmem:[#allocation6] sm:$0xff]
      %v191 = vld [vmem:[#allocation6 + $0x8] sm:$0xff]
      %v192 = vsel %vm176, 1, 0
      %v193 = vsel %vm177, 1, 0
      %v194 = vcvt.s32.f32 %v192
      %v195 = vcvt.s32.f32 %v193
      %v196 = vadd.f32 %v190, %v194
      %v197 = vadd.f32 %v191, %v195
      %198 = vst.msk [vmem:[#allocation6] sm:$0xff] %vm152, %v196
      %199 = vst.msk [vmem:[#allocation6 + $0x8] sm:$0xff] %vm152, %v197
    $region37: #{tpu_custom_call.1} parent=1 // pred_fallthru
      _
    // Predicated region
    $region38: #{tpu_custom_call.1} parent=1 // pred_check
      _
    $region39: #{tpu_custom_call.1} parent=1 // pred_check_branch
      %201 = sbr.rel (%p70) target = $region41
    $region40: #{tpu_custom_call.1} parent=1 // pred_region
      %v202 = vld [vmem:[%s0] sm:$0x3]
      %v203 = vld [vmem:[%s1] sm:$0x3]
      %v204 = vld [vmem:[%s2] sm:$0x3]
      %v205 = vld [vmem:[%s3] sm:$0x3]
      %v206 = vsub.f32 %v202, %v203
      %v207 = vmul.f32 %v206, 1.442695
      %v208 = vpow.pop %v207
      %v209 = vmul.f32 %v208, %v204
      %v210 = vmax.f32 %v208, 0.8
      %v211 = vmin.f32 %v210, 1.2
      %v212 = vmul.f32 %v211, %v204
      %v213 = vmin.f32 %v209, %v212
      %v214 = vsub.f32 0.0, %v213
      %v215 = vmul.f32 %v214, %v205
      %vm216 = vcmask 58368
      %v217 = vsel %vm216, %v215, 0.0
      %218 = vadd.xlane.f32.xlu0 %v217
      %v219 = vpop.xlane.xlu0 %218
      %v220 = vsel %vm216, %v205, 0.0
      %221 = vadd.xlane.f32.xlu0 %v220
      %v222 = vpop.xlane.xlu0 %221
      %v223 = vrcp.pop %v222
      %v224 = vmul.f32 %v219, %v223
      %vm225 = vcmask 1024
      %v226 = vsel %vm225, %v224, 0.0
      %227 = vadd.xlane.f32.xlu0 %v226
      %v228 = vpop.xlane.xlu0 %227
      %v229 = vrot.slane %v228, 4
      %v230 = vadd.f32 %v228, %v229
      %v231 = vrot.slane %v230, 2
      %v232 = vadd.f32 %v230, %v231
      %v233 = vrot.slane %v232, 1
      %v234 = vadd.f32 %v232, %v233
      %s235 = vtos %v234
      %v236 = vrcp.pop 2.0
      %s237 = vtos %v236
      %s238 = smul.f32 %s235, %s237
      %v239 = vld [vmem:[#allocation5] sm:$0xff]
      %v240 = vld [vmem:[#allocation5 + $0x8] sm:$0xff]
      %v241 = vsel %vm152, %v239, 0.0
      %v242 = vsel %vm152, %v240, 0.0
      %v243 = vadd.f32 %v241, %v242
      %244 = vadd.xlane.f32.xlu0 %v243
      %v245 = vpop.xlane.xlu0 %244
      %v246 = vrot.slane %v245, 4
      %v247 = vadd.f32 %v245, %v246
      %v248 = vrot.slane %v247, 2
      %v249 = vadd.f32 %v247, %v248
      %v250 = vrot.slane %v249, 1
      %v251 = vadd.f32 %v249, %v250
      %s252 = vtos %v251
      %v253 = vld [vmem:[#allocation6] sm:$0xff]
      %v254 = vld [vmem:[#allocation6 + $0x8] sm:$0xff]
      %v255 = vsel %vm152, %v253, 0.0
      %v256 = vsel %vm152, %v254, 0.0
      %v257 = vadd.f32 %v255, %v256
      %258 = vadd.xlane.f32.xlu0 %v257
      %v259 = vpop.xlane.xlu0 %258
      %v260 = vrot.slane %v259, 4
      %v261 = vadd.f32 %v259, %v260
      %v262 = vrot.slane %v261, 2
      %v263 = vadd.f32 %v261, %v262
      %v264 = vrot.slane %v263, 1
      %v265 = vadd.f32 %v263, %v264
      %s266 = vtos %v265
      %v267 = vlaneseq
      %v268 = vshrl.u32 %v267, 7
      %vm269 = vcmp.eq.s32.totalorder %v268, 0
      %vm270 = vcmp.eq.s32.totalorder %v96, 0
      %vm271 = vmand %vm269, %vm270
      %v272 = vstv %s252
      %v273 = vsel %vm271, %v272, 0.0
      %vm274 = vcmp.eq.s32.totalorder %v96, 1
      %vm275 = vmand %vm269, %vm274
      %v276 = vstv %s266
      %v277 = vsel %vm275, %v276, %v273
      %vm278 = vcmp.eq.s32.totalorder %v96, 2
      %vm279 = vmand %vm269, %vm278
      %v280 = vstv %s238
      %v281 = vsel %vm279, %v280, %v277
      %282 = vst [vmem:[#allocation7] sm:$0xff] %v281
    $region41: #{tpu_custom_call.1} parent=1 // pred_fallthru
      _
    // Predicated region
    $region42: #{tpu_custom_call.1} parent=1 // pred_check
      _
    $region43: #{tpu_custom_call.1} parent=1 // pred_check_branch
      %284 = sbr.rel (0) target = $region45
    $region44: #{tpu_custom_call.1} parent=1 // pred_region
      %s286 = ssub.s32 128, 128
      %287 = vsyncadd [#allocation8], %s286
      %s289 = sshll.u32 [#allocation7], 4
      %s290 = int_to_ptr.vmem [resolvable:$true] %s289
      %292 = dma.vmem_to_hbm [thread:$0]  %s290, 128, %s6, [#allocation8]
    $region45: #{tpu_custom_call.1} parent=1 // pred_fallthru
      _
    // Predicated region
    $region46: #{tpu_custom_call.1} parent=1 // pred_check
      _
    $region47: #{tpu_custom_call.1} parent=1 // pred_check_branch
      %294 = sbr.rel (0) target = $region49
    $region48: #{tpu_custom_call.1} parent=1 // pred_region
      %295 = dma.done [#allocation8], 128
    $region49: #{tpu_custom_call.1} parent=1 // pred_fallthru
      _
    %296 = vsyncpa [#allocation8], 1

</llo_original>
